<compile_context>
chip_gen: v7x
topology: tpu7x:2x2x1
jax: 0.10.0
libtpu: 0.0.40
codegen_flags: <defaults>
</compile_context>

<pallas_src>
import jax
import jax.numpy as jnp
import numpy as np
from jax.experimental import pallas as pl
from jax.experimental.pallas import tpu as pltpu

LN_EPS = 1e-5


# ------------------------------ the kernel ----------------------------------
def _cnn_kernel(x_ref, w1_ref, b1_ref, ln1_ref, w2_ref, b2_ref, ln2_ref,
                w3_ref, b3_ref, hw1_ref, hw2_ref, hw3_ref, hb12_ref, hb3_ref,
                out_ref, pool_buf):
    f32 = jnp.float32

    def conv1d_same(h, w_ref, b_ref):
        # Conv1d(k=3, stride=1, pad=1) on one example in (Lcur, Cin) layout,
        # as three accumulated matmuls (no lane-axis concat, no edge masks:
        # the zero row *is* the conv's zero padding).
        Lcur, Cin = h.shape
        zrow = jnp.zeros((1, Cin), f32)
        prev = jnp.concatenate([zrow, h[:-1, :]], axis=0)     # h[l-1], 0 at l=0
        nxt = jnp.concatenate([h[1:, :], zrow], axis=0)       # h[l+1], 0 at l=Lcur-1
        y = (jnp.dot(prev, w_ref[0], preferred_element_type=f32)
             + jnp.dot(h, w_ref[1], preferred_element_type=f32)
             + jnp.dot(nxt, w_ref[2], preferred_element_type=f32))
        return y + b_ref[...]

    def layer_norm(h, ln_ref):
        # torch LayerNorm((C, Lcur)): per-example stats over all C*Lcur
        # elements; layout-invariant, so (Lcur, C) gives identical math.
        # Two-pass variance for numerical robustness.
        Lcur, Cin = h.shape
        inv_n = 1.0 / float(Lcur * Cin)
        mean = jnp.sum(h, keepdims=True) * inv_n               # (1, 1)
        centered = h - mean
        var = jnp.sum(centered * centered, keepdims=True) * inv_n
        return centered * jax.lax.rsqrt(var + LN_EPS) * ln_ref[0] + ln_ref[1]

    def maxpool2(h):
        # MaxPool1d(2): pairwise max of adjacent length positions via two
        # stride-2 reads from a VMEM scratch (no selection matmul, no reshape
        # relayout).  Odd lengths drop the trailing row, like torch.
        Lcur, Cin = h.shape
        Lout = Lcur // 2
        pool_buf[0:Lcur, :] = h
        ev = pool_buf[pl.ds(0, Lout, stride=2), :]             # rows 0, 2, ...
        od = pool_buf[pl.ds(1, Lout, stride=2), :]             # rows 1, 3, ...
        return jnp.maximum(ev, od)

    h = x_ref[0]                                               # (L, C)

    # conv block.  nn.LeakyReLU(True): negative_slope == 1.0 -> identity.
    h = conv1d_same(h, w1_ref, b1_ref)                         # (L, C)
    h = layer_norm(h, ln1_ref)
    h = maxpool2(h)                                            # (L//2, C)
    h = conv1d_same(h, w2_ref, b2_ref)
    h = layer_norm(h, ln2_ref)
    h = maxpool2(h)                                            # (L//4, C)
    h = conv1d_same(h, w3_ref, b3_ref)                         # (L//4, conv_out)

    # torch.max(out, dim=1)[0]: per-example max over the length axis.
    pooled = jnp.max(h, axis=0, keepdims=True)                 # (1, conv_out)

    # Fused [regression | classification] heads.
    # Dropout(p=0.6) and LeakyReLU(True) are identity at inference.
    z = jnp.dot(pooled, hw1_ref[...], preferred_element_type=f32) + hb12_ref[0:1, :]
    z = jnp.dot(z, hw2_ref[...], preferred_element_type=f32) + hb12_ref[1:2, :]
    z = jnp.dot(z, hw3_ref[...], preferred_element_type=f32) + hb3_ref[...]   # (1, 2)
    col = jax.lax.broadcasted_iota(jnp.int32, z.shape, 1)
    out_ref[0] = jnp.where(col == 0, z, jax.nn.sigmoid(z))     # col0=reg, col1=cls


# ------------------------------ the wrapper ----------------------------------
def pack_params(params, conv_out):
    """Pack the 22 module parameters into 13 kernel-friendly slabs."""
    co4 = conv_out // 4
    f32 = jnp.float32

    ln1 = jnp.stack([params["g1"], params["be1"]], axis=0)          # (2, L, C)
    ln2 = jnp.stack([params["g2"], params["be2"]], axis=0)          # (2, L//2, C)
    # heads: [regression | classification] fused along the feature axis.
    hw1 = jnp.concatenate([params["wr1"], params["wc1"]], axis=1)   # (conv_out, 2*co4)
    zsq = jnp.zeros((co4, co4), f32)
    hw2 = jnp.concatenate(
        [jnp.concatenate([params["wr2"], zsq], axis=1),
         jnp.concatenate([zsq, params["wc2"]], axis=1)], axis=0)    # block-diag
    zcol = jnp.zeros((co4, 1), f32)
    hw3 = jnp.concatenate(
        [jnp.concatenate([params["wr3"], zcol], axis=1),
         jnp.concatenate([zcol, params["wc3"]], axis=1)], axis=0)   # (2*co4, 2)
    hb12 = jnp.concatenate(
        [jnp.concatenate([params["br1"], params["bc1"]], axis=1),
         jnp.concatenate([params["br2"], params["bc2"]], axis=1)], axis=0)
    hb3 = jnp.concatenate([params["br3"], params["bc3"]], axis=1)   # (1, 2)
    return (params["w1"], params["b1"], ln1,
            params["w2"], params["b2"], ln2,
            params["w3"], params["b3"],
            hw1, hw2, hw3, hb12, hb3)


def _padded_f32_bytes(shape):
    """f32 bytes of `shape` after (8, 128) sublane/lane padding."""
    shape = tuple(int(s) for s in shape)
    lead = 1
    for s in shape[:-2]:
        lead *= s
    rows = shape[-2] if len(shape) >= 2 else 1
    cols = shape[-1]
    return lead * (-(-rows // 8) * 8) * (-(-cols // 128) * 128) * 4


def _vmem_limit_bytes(packed, L, C, conv_out):
    param_bytes = sum(_padded_f32_bytes(p.shape) for p in packed)
    io_bytes = _padded_f32_bytes((1, L, C)) + _padded_f32_bytes((1, 1, 2))
    act_bytes = (_padded_f32_bytes((L, C)) * 8                    # conv/LN temporaries
                 + _padded_f32_bytes((L // 4 + 1, conv_out)) * 2)  # conv3 output
    scratch_bytes = _padded_f32_bytes((L, C))
    est = 2 * (param_bytes + io_bytes) + act_bytes + scratch_bytes
    # Clamp so the same setting is legal on v5e (16 MiB default scoped limit),
    # v6e (32 MiB / 128 MiB) and v7x (32 MiB / 64 MiB physical).
    return int(min(max(est, 32 * 2**20), 64 * 2**20))


def cnn_model_forward(x, params):
    """x: (B, seq_len, in_dim) float32 == CNNModel.forward's `data`."""
    B, L, C = x.shape
    conv_out = params["w3"].shape[2]
    assert params["g2"].shape[0] == L // 2, "LayerNorm2 affine must be (seq_len//2, C)"
    packed = pack_params(params, conv_out)

    x_spec = pl.BlockSpec((1, L, C), lambda b: (b, 0, 0))

    def const_spec(a):
        # Whole array, resident across the batch grid (constant block index).
        return pl.BlockSpec(a.shape, lambda b, nd=a.ndim: (0,) * nd)

    out = pl.pallas_call(
        _cnn_kernel,
        grid=(B,),
        out_shape=jax.ShapeDtypeStruct((B, 1, 2), jnp.float32),
        in_specs=[x_spec] + [const_spec(p) for p in packed],
        out_specs=pl.BlockSpec((1, 1, 2), lambda b: (b, 0, 0)),
        scratch_shapes=[pltpu.VMEM((L, C), jnp.float32)],   # maxpool staging buffer
        compiler_params=pltpu.CompilerParams(
            dimension_semantics=("parallel",),
            vmem_limit_bytes=_vmem_limit_bytes(packed, L, C, conv_out)),
    )(x, *packed)

    out = out.reshape(B, 2)
    reg = out[:, 0:1]
    cls = out[:, 1:2]
    return cls, reg


# -------------------------- pure-JAX reference -------------------------------
def _reference_forward(x, p):
    P = jax.lax.Precision.HIGHEST

    def conv(h, w, b):                     # h: (B, L, Cin); w: (3, Cin, Cout)
        zp = jnp.zeros_like(h[:, :1, :])
        prev = jnp.concatenate([zp, h[:, :-1, :]], axis=1)
        nxt = jnp.concatenate([h[:, 1:, :], zp], axis=1)
        y = (jnp.einsum("blc,co->blo", prev, w[0], precision=P)
             + jnp.einsum("blc,co->blo", h, w[1], precision=P)
             + jnp.einsum("blc,co->blo", nxt, w[2], precision=P))
        return y + b[None]

    def ln(h, g, be):                      # g, be: (L, C) (transposed torch layout)
        mean = jnp.mean(h, axis=(1, 2), keepdims=True)
        var = jnp.mean((h - mean) ** 2, axis=(1, 2), keepdims=True)
        return (h - mean) * jax.lax.rsqrt(var + LN_EPS) * g[None] + be[None]

    def pool(h):
        b, l, c = h.shape
        l2 = l // 2
        return jnp.max(h[:, :2 * l2, :].reshape(b, l2, 2, c), axis=2)

    h = pool(ln(conv(x, p["w1"], p["b1"]), p["g1"], p["be1"]))
    h = pool(ln(conv(h, p["w2"], p["b2"]), p["g2"], p["be2"]))
    h = conv(h, p["w3"], p["b3"])
    pooled = jnp.max(h, axis=1)            # (B, conv_out)

    def lin(a, w, b):
        return jnp.dot(a, w, precision=P) + b

    reg = lin(lin(lin(pooled, p["wr1"], p["br1"]), p["wr2"], p["br2"]),
              p["wr3"], p["br3"])
    cls = jax.nn.sigmoid(
        lin(lin(lin(pooled, p["wc1"], p["bc1"]), p["wc2"], p["bc2"]),
            p["wc3"], p["bc3"]))
    return cls, reg


# --------------------------- deterministic init -------------------------------
def init_params(key, in_dim, conv_out, seq_len):
    co4 = conv_out // 4
    keys = jax.random.split(key, 9)

    def conv_w(k, cin, cout):
        # torch Conv1d weight (Cout, Cin, 3), kaiming-ish scale; stored
        # pre-transposed as (3, Cin, Cout): tap 0 multiplies x[l-1].
        w = jax.random.normal(k, (cout, cin, 3), jnp.float32) * ((3 * cin) ** -0.5)
        return jnp.transpose(w, (2, 1, 0))

    def lin_w(k, fin, fout):
        # nn.init.normal_(weight, 0, 0.01); stored transposed as (fin, fout).
        return jax.random.normal(k, (fout, fin), jnp.float32).T * 0.01

    z = lambda *s: jnp.zeros(s, jnp.float32)
    o = lambda *s: jnp.ones(s, jnp.float32)
    return dict(
        w1=conv_w(keys[0], in_dim, in_dim), b1=z(1, in_dim),
        g1=o(seq_len, in_dim), be1=z(seq_len, in_dim),   # LayerNorm affine, (L, C) layout
        w2=conv_w(keys[1], in_dim, in_dim), b2=z(1, in_dim),
        g2=o(seq_len // 2, in_dim), be2=z(seq_len // 2, in_dim),
        w3=conv_w(keys[2], in_dim, conv_out), b3=z(1, conv_out),
        wr1=lin_w(keys[3], conv_out, co4), br1=z(1, co4),
        wr2=lin_w(keys[4], co4, co4), br2=z(1, co4),
        wr3=lin_w(keys[5], co4, 1), br3=z(1, 1),
        wc1=lin_w(keys[6], conv_out, co4), bc1=z(1, co4),
        wc2=lin_w(keys[7], co4, co4), bc2=z(1, co4),
        wc3=lin_w(keys[8], co4, 1), bc3=z(1, 1),
    )


if __name__ == "__main__":
    # Small shapes consistent with CNNModel(in_dim, conv_out, seq_len).
    B, SEQ_LEN, IN_DIM, CONV_OUT = 2, 16, 8, 64

    key = jax.random.PRNGKey(0)
    kx, kp = jax.random.split(key)
    params = init_params(kp, IN_DIM, CONV_OUT, SEQ_LEN)
    x = jax.random.normal(kx, (B, SEQ_LEN, IN_DIM), jnp.float32)

    cls_out, reg_out = cnn_model_forward(x, params)
    jax.block_until_ready((cls_out, reg_out))
    assert cls_out.shape == (B, 1) and reg_out.shape == (B, 1)

    ref_cls, ref_reg = _reference_forward(x, params)
    np.testing.assert_allclose(np.asarray(cls_out), np.asarray(ref_cls),
                               rtol=1e-3, atol=1e-4)
    np.testing.assert_allclose(np.asarray(reg_out), np.asarray(ref_reg),
                               rtol=1e-3, atol=1e-4)

    print("KERNEL_OK")
</pallas_src>

<mosaic_0001>
module attributes {stable_mosaic.version = 11 : i64} {
  func.func @_cnn_kernel(%arg0: i32, %arg1: memref<1x16x8xf32, #tpu.memory_space<vmem>>, %arg2: memref<3x8x8xf32, #tpu.memory_space<vmem>>, %arg3: memref<1x8xf32, #tpu.memory_space<vmem>>, %arg4: memref<2x16x8xf32, #tpu.memory_space<vmem>>, %arg5: memref<3x8x8xf32, #tpu.memory_space<vmem>>, %arg6: memref<1x8xf32, #tpu.memory_space<vmem>>, %arg7: memref<2x8x8xf32, #tpu.memory_space<vmem>>, %arg8: memref<3x8x64xf32, #tpu.memory_space<vmem>>, %arg9: memref<1x64xf32, #tpu.memory_space<vmem>>, %arg10: memref<64x32xf32, #tpu.memory_space<vmem>>, %arg11: memref<32x32xf32, #tpu.memory_space<vmem>>, %arg12: memref<32x2xf32, #tpu.memory_space<vmem>>, %arg13: memref<2x32xf32, #tpu.memory_space<vmem>>, %arg14: memref<1x2xf32, #tpu.memory_space<vmem>>, %arg15: memref<1x1x2xf32, #tpu.memory_space<vmem>>, %arg16: memref<16x8xf32, #tpu.memory_space<vmem>>) attributes {dimension_semantics = [#tpu.dimension_semantics<parallel>], iteration_bounds = array<i64: 2>, scalar_prefetch = 0 : i64, scratch_operands = 1 : i64, tpu.core_type = #tpu.core_type<tc>, window_params = [{transform_indices = @transform_0, window_bounds = array<i64: 1, 16, 8>}, {pipeline_mode = #tpu.pipeline_mode<synchronous>, transform_indices = @transform_1, window_bounds = array<i64: 3, 8, 8>}, {pipeline_mode = #tpu.pipeline_mode<synchronous>, transform_indices = @transform_2, window_bounds = array<i64: 1, 8>}, {pipeline_mode = #tpu.pipeline_mode<synchronous>, transform_indices = @transform_3, window_bounds = array<i64: 2, 16, 8>}, {pipeline_mode = #tpu.pipeline_mode<synchronous>, transform_indices = @transform_4, window_bounds = array<i64: 3, 8, 8>}, {pipeline_mode = #tpu.pipeline_mode<synchronous>, transform_indices = @transform_5, window_bounds = array<i64: 1, 8>}, {pipeline_mode = #tpu.pipeline_mode<synchronous>, transform_indices = @transform_6, window_bounds = array<i64: 2, 8, 8>}, {pipeline_mode = #tpu.pipeline_mode<synchronous>, transform_indices = @transform_7, window_bounds = array<i64: 3, 8, 64>}, {pipeline_mode = #tpu.pipeline_mode<synchronous>, transform_indices = @transform_8, window_bounds = array<i64: 1, 64>}, {pipeline_mode = #tpu.pipeline_mode<synchronous>, transform_indices = @transform_9, window_bounds = array<i64: 64, 32>}, {pipeline_mode = #tpu.pipeline_mode<synchronous>, transform_indices = @transform_10, window_bounds = array<i64: 32, 32>}, {pipeline_mode = #tpu.pipeline_mode<synchronous>, transform_indices = @transform_11, window_bounds = array<i64: 32, 2>}, {pipeline_mode = #tpu.pipeline_mode<synchronous>, transform_indices = @transform_12, window_bounds = array<i64: 2, 32>}, {pipeline_mode = #tpu.pipeline_mode<synchronous>, transform_indices = @transform_13, window_bounds = array<i64: 1, 2>}, {transform_indices = @transform_14, window_bounds = array<i64: 1, 1, 2>}]} {
    %c0 = arith.constant 0 : index
    %c0_0 = arith.constant 0 : index
    %c0_1 = arith.constant 0 : index
    %0 = vector.load %arg1[%c0, %c0_0, %c0_1] : memref<1x16x8xf32, #tpu.memory_space<vmem>>, vector<1x16x8xf32>
    %1 = vector.shape_cast %0 : vector<1x16x8xf32> to vector<16x8xf32>
    %cst = arith.constant 0.000000e+00 : f32
    %2 = vector.broadcast %cst : f32 to vector<1x8xf32>
    %3 = vector.extract_strided_slice %1 {offsets = [0, 0], sizes = [15, 8], strides = [1, 1]} : vector<16x8xf32> to vector<15x8xf32>
    %4 = tpu.concatenate %2, %3 in 0 : vector<1x8xf32>, vector<15x8xf32> -> vector<16x8xf32>
    %5 = vector.extract_strided_slice %1 {offsets = [1, 0], sizes = [15, 8], strides = [1, 1]} : vector<16x8xf32> to vector<15x8xf32>
    %6 = tpu.concatenate %5, %2 in 0 : vector<15x8xf32>, vector<1x8xf32> -> vector<16x8xf32>
    %c0_2 = arith.constant 0 : index
    %c0_3 = arith.constant 0 : index
    %c0_4 = arith.constant 0 : index
    %7 = vector.load %arg2[%c0_2, %c0_3, %c0_4] : memref<3x8x8xf32, #tpu.memory_space<vmem>>, vector<1x8x8xf32>
    %8 = vector.shape_cast %7 : vector<1x8x8xf32> to vector<8x8xf32>
    %cst_5 = arith.constant dense<0.000000e+00> : vector<16x8xf32>
    %9 = tpu.matmul %4, %8, %cst_5 {dimension_numbers = #tpu.dot_dimension_numbers<[1], [0], [0], [1], [0, 0, 1, 1], [], []>} : vector<16x8xf32>, vector<8x8xf32>, vector<16x8xf32> -> vector<16x8xf32>
    %c1 = arith.constant 1 : index
    %c0_6 = arith.constant 0 : index
    %c0_7 = arith.constant 0 : index
    %10 = vector.load %arg2[%c1, %c0_6, %c0_7] : memref<3x8x8xf32, #tpu.memory_space<vmem>>, vector<1x8x8xf32>
    %11 = vector.shape_cast %10 : vector<1x8x8xf32> to vector<8x8xf32>
    %cst_8 = arith.constant dense<0.000000e+00> : vector<16x8xf32>
    %12 = tpu.matmul %1, %11, %cst_8 {dimension_numbers = #tpu.dot_dimension_numbers<[1], [0], [0], [1], [0, 0, 1, 1], [], []>} : vector<16x8xf32>, vector<8x8xf32>, vector<16x8xf32> -> vector<16x8xf32>
    %13 = arith.addf %9, %12 : vector<16x8xf32>
    %c2 = arith.constant 2 : index
    %c0_9 = arith.constant 0 : index
    %c0_10 = arith.constant 0 : index
    %14 = vector.load %arg2[%c2, %c0_9, %c0_10] : memref<3x8x8xf32, #tpu.memory_space<vmem>>, vector<1x8x8xf32>
    %15 = vector.shape_cast %14 : vector<1x8x8xf32> to vector<8x8xf32>
    %cst_11 = arith.constant dense<0.000000e+00> : vector<16x8xf32>
    %16 = tpu.matmul %6, %15, %cst_11 {dimension_numbers = #tpu.dot_dimension_numbers<[1], [0], [0], [1], [0, 0, 1, 1], [], []>} : vector<16x8xf32>, vector<8x8xf32>, vector<16x8xf32> -> vector<16x8xf32>
    %17 = arith.addf %13, %16 : vector<16x8xf32>
    %c0_12 = arith.constant 0 : index
    %c0_13 = arith.constant 0 : index
    %18 = vector.load %arg3[%c0_12, %c0_13] : memref<1x8xf32, #tpu.memory_space<vmem>>, vector<1x8xf32>
    %19 = vector.broadcast %18 : vector<1x8xf32> to vector<16x8xf32>
    %20 = arith.addf %17, %19 : vector<16x8xf32>
    %21 = vector.shape_cast %20 : vector<16x8xf32> to vector<1x16x8xf32>
    %cst_14 = arith.constant dense<0.000000e+00> : vector<1xf32>
    %22 = vector.multi_reduction <add>, %21, %cst_14 [1, 2] : vector<1x16x8xf32> to vector<1xf32>
    %23 = vector.shape_cast %22 : vector<1xf32> to vector<1x1x1xf32>
    %24 = vector.extract %23[0, 0, 0] : f32 from vector<1x1x1xf32>
    %25 = vector.broadcast %24 : f32 to vector<1x1xf32>
    %cst_15 = arith.constant 7.812500e-03 : f32
    %26 = vector.broadcast %cst_15 : f32 to vector<1x1xf32>
    %27 = arith.mulf %25, %26 : vector<1x1xf32>
    %28 = vector.broadcast %27 : vector<1x1xf32> to vector<16x8xf32>
    %29 = arith.subf %20, %28 : vector<16x8xf32>
    %30 = arith.mulf %29, %29 : vector<16x8xf32>
    %31 = vector.shape_cast %30 : vector<16x8xf32> to vector<1x16x8xf32>
    %cst_16 = arith.constant dense<0.000000e+00> : vector<1xf32>
    %32 = vector.multi_reduction <add>, %31, %cst_16 [1, 2] : vector<1x16x8xf32> to vector<1xf32>
    %33 = vector.shape_cast %32 : vector<1xf32> to vector<1x1x1xf32>
    %34 = vector.extract %33[0, 0, 0] : f32 from vector<1x1x1xf32>
    %35 = vector.broadcast %34 : f32 to vector<1x1xf32>
    %cst_17 = arith.constant 7.812500e-03 : f32
    %36 = vector.broadcast %cst_17 : f32 to vector<1x1xf32>
    %37 = arith.mulf %35, %36 : vector<1x1xf32>
    %cst_18 = arith.constant 9.99999974E-6 : f32
    %38 = vector.broadcast %cst_18 : f32 to vector<1x1xf32>
    %39 = arith.addf %37, %38 : vector<1x1xf32>
    %40 = math.rsqrt %39 : vector<1x1xf32>
    %41 = vector.broadcast %40 : vector<1x1xf32> to vector<16x8xf32>
    %42 = arith.mulf %29, %41 : vector<16x8xf32>
    %c0_19 = arith.constant 0 : index
    %c0_20 = arith.constant 0 : index
    %c0_21 = arith.constant 0 : index
    %43 = vector.load %arg4[%c0_19, %c0_20, %c0_21] : memref<2x16x8xf32, #tpu.memory_space<vmem>>, vector<1x16x8xf32>
    %44 = vector.shape_cast %43 : vector<1x16x8xf32> to vector<16x8xf32>
    %45 = arith.mulf %42, %44 : vector<16x8xf32>
    %c1_22 = arith.constant 1 : index
    %c0_23 = arith.constant 0 : index
    %c0_24 = arith.constant 0 : index
    %46 = vector.load %arg4[%c1_22, %c0_23, %c0_24] : memref<2x16x8xf32, #tpu.memory_space<vmem>>, vector<1x16x8xf32>
    %47 = vector.shape_cast %46 : vector<1x16x8xf32> to vector<16x8xf32>
    %48 = arith.addf %45, %47 : vector<16x8xf32>
    %c0_25 = arith.constant 0 : index
    %c0_26 = arith.constant 0 : index
    %49 = vector.load %arg16[%c0_25, %c0_26] : memref<16x8xf32, #tpu.memory_space<vmem>>, vector<16x8xf32>
    tpu.vector_store %arg16[%c0_25, %c0_26], %48 {strides = array<i32>} : memref<16x8xf32, #tpu.memory_space<vmem>>, vector<16x8xf32>,
    %c0_27 = arith.constant 0 : index
    %c0_28 = arith.constant 0 : index
    %50 = tpu.strided_load %arg16[%c0_27, %c0_28] {strides = array<i32: 2, 1>} : memref<16x8xf32, #tpu.memory_space<vmem>>, vector<8x8xf32>
    %c1_29 = arith.constant 1 : index
    %c0_30 = arith.constant 0 : index
    %51 = tpu.strided_load %arg16[%c1_29, %c0_30] {strides = array<i32: 2, 1>} : memref<16x8xf32, #tpu.memory_space<vmem>>, vector<8x8xf32>
    %52 = arith.maximumf %50, %51 : vector<8x8xf32>
    %cst_31 = arith.constant 0.000000e+00 : f32
    %53 = vector.broadcast %cst_31 : f32 to vector<1x8xf32>
    %54 = vector.extract_strided_slice %52 {offsets = [0, 0], sizes = [7, 8], strides = [1, 1]} : vector<8x8xf32> to vector<7x8xf32>
    %55 = tpu.concatenate %53, %54 in 0 : vector<1x8xf32>, vector<7x8xf32> -> vector<8x8xf32>
    %56 = vector.extract_strided_slice %52 {offsets = [1, 0], sizes = [7, 8], strides = [1, 1]} : vector<8x8xf32> to vector<7x8xf32>
    %57 = tpu.concatenate %56, %53 in 0 : vector<7x8xf32>, vector<1x8xf32> -> vector<8x8xf32>
    %c0_32 = arith.constant 0 : index
    %c0_33 = arith.constant 0 : index
    %c0_34 = arith.constant 0 : index
    %58 = vector.load %arg5[%c0_32, %c0_33, %c0_34] : memref<3x8x8xf32, #tpu.memory_space<vmem>>, vector<1x8x8xf32>
    %59 = vector.shape_cast %58 : vector<1x8x8xf32> to vector<8x8xf32>
    %cst_35 = arith.constant dense<0.000000e+00> : vector<8x8xf32>
    %60 = tpu.matmul %55, %59, %cst_35 {dimension_numbers = #tpu.dot_dimension_numbers<[1], [0], [0], [1], [0, 0, 1, 1], [], []>} : vector<8x8xf32>, vector<8x8xf32>, vector<8x8xf32> -> vector<8x8xf32>
    %c1_36 = arith.constant 1 : index
    %c0_37 = arith.constant 0 : index
    %c0_38 = arith.constant 0 : index
    %61 = vector.load %arg5[%c1_36, %c0_37, %c0_38] : memref<3x8x8xf32, #tpu.memory_space<vmem>>, vector<1x8x8xf32>
    %62 = vector.shape_cast %61 : vector<1x8x8xf32> to vector<8x8xf32>
    %cst_39 = arith.constant dense<0.000000e+00> : vector<8x8xf32>
    %63 = tpu.matmul %52, %62, %cst_39 {dimension_numbers = #tpu.dot_dimension_numbers<[1], [0], [0], [1], [0, 0, 1, 1], [], []>} : vector<8x8xf32>, vector<8x8xf32>, vector<8x8xf32> -> vector<8x8xf32>
    %64 = arith.addf %60, %63 : vector<8x8xf32>
    %c2_40 = arith.constant 2 : index
    %c0_41 = arith.constant 0 : index
    %c0_42 = arith.constant 0 : index
    %65 = vector.load %arg5[%c2_40, %c0_41, %c0_42] : memref<3x8x8xf32, #tpu.memory_space<vmem>>, vector<1x8x8xf32>
    %66 = vector.shape_cast %65 : vector<1x8x8xf32> to vector<8x8xf32>
    %cst_43 = arith.constant dense<0.000000e+00> : vector<8x8xf32>
    %67 = tpu.matmul %57, %66, %cst_43 {dimension_numbers = #tpu.dot_dimension_numbers<[1], [0], [0], [1], [0, 0, 1, 1], [], []>} : vector<8x8xf32>, vector<8x8xf32>, vector<8x8xf32> -> vector<8x8xf32>
    %68 = arith.addf %64, %67 : vector<8x8xf32>
    %c0_44 = arith.constant 0 : index
    %c0_45 = arith.constant 0 : index
    %69 = vector.load %arg6[%c0_44, %c0_45] : memref<1x8xf32, #tpu.memory_space<vmem>>, vector<1x8xf32>
    %70 = vector.broadcast %69 : vector<1x8xf32> to vector<8x8xf32>
    %71 = arith.addf %68, %70 : vector<8x8xf32>
    %72 = vector.shape_cast %71 : vector<8x8xf32> to vector<1x8x8xf32>
    %cst_46 = arith.constant dense<0.000000e+00> : vector<1xf32>
    %73 = vector.multi_reduction <add>, %72, %cst_46 [1, 2] : vector<1x8x8xf32> to vector<1xf32>
    %74 = vector.shape_cast %73 : vector<1xf32> to vector<1x1x1xf32>
    %75 = vector.extract %74[0, 0, 0] : f32 from vector<1x1x1xf32>
    %76 = vector.broadcast %75 : f32 to vector<1x1xf32>
    %cst_47 = arith.constant 1.562500e-02 : f32
    %77 = vector.broadcast %cst_47 : f32 to vector<1x1xf32>
    %78 = arith.mulf %76, %77 : vector<1x1xf32>
    %79 = vector.broadcast %78 : vector<1x1xf32> to vector<8x8xf32>
    %80 = arith.subf %71, %79 : vector<8x8xf32>
    %81 = arith.mulf %80, %80 : vector<8x8xf32>
    %82 = vector.shape_cast %81 : vector<8x8xf32> to vector<1x8x8xf32>
    %cst_48 = arith.constant dense<0.000000e+00> : vector<1xf32>
    %83 = vector.multi_reduction <add>, %82, %cst_48 [1, 2] : vector<1x8x8xf32> to vector<1xf32>
    %84 = vector.shape_cast %83 : vector<1xf32> to vector<1x1x1xf32>
    %85 = vector.extract %84[0, 0, 0] : f32 from vector<1x1x1xf32>
    %86 = vector.broadcast %85 : f32 to vector<1x1xf32>
    %cst_49 = arith.constant 1.562500e-02 : f32
    %87 = vector.broadcast %cst_49 : f32 to vector<1x1xf32>
    %88 = arith.mulf %86, %87 : vector<1x1xf32>
    %cst_50 = arith.constant 9.99999974E-6 : f32
    %89 = vector.broadcast %cst_50 : f32 to vector<1x1xf32>
    %90 = arith.addf %88, %89 : vector<1x1xf32>
    %91 = math.rsqrt %90 : vector<1x1xf32>
    %92 = vector.broadcast %91 : vector<1x1xf32> to vector<8x8xf32>
    %93 = arith.mulf %80, %92 : vector<8x8xf32>
    %c0_51 = arith.constant 0 : index
    %c0_52 = arith.constant 0 : index
    %c0_53 = arith.constant 0 : index
    %94 = vector.load %arg7[%c0_51, %c0_52, %c0_53] : memref<2x8x8xf32, #tpu.memory_space<vmem>>, vector<1x8x8xf32>
    %95 = vector.shape_cast %94 : vector<1x8x8xf32> to vector<8x8xf32>
    %96 = arith.mulf %93, %95 : vector<8x8xf32>
    %c1_54 = arith.constant 1 : index
    %c0_55 = arith.constant 0 : index
    %c0_56 = arith.constant 0 : index
    %97 = vector.load %arg7[%c1_54, %c0_55, %c0_56] : memref<2x8x8xf32, #tpu.memory_space<vmem>>, vector<1x8x8xf32>
    %98 = vector.shape_cast %97 : vector<1x8x8xf32> to vector<8x8xf32>
    %99 = arith.addf %96, %98 : vector<8x8xf32>
    %c0_57 = arith.constant 0 : index
    %c0_58 = arith.constant 0 : index
    %100 = vector.load %arg16[%c0_57, %c0_58] : memref<16x8xf32, #tpu.memory_space<vmem>>, vector<8x8xf32>
    tpu.vector_store %arg16[%c0_57, %c0_58], %99 {strides = array<i32>} : memref<16x8xf32, #tpu.memory_space<vmem>>, vector<8x8xf32>,
    %c0_59 = arith.constant 0 : index
    %c0_60 = arith.constant 0 : index
    %101 = tpu.strided_load %arg16[%c0_59, %c0_60] {strides = array<i32: 2, 1>} : memref<16x8xf32, #tpu.memory_space<vmem>>, vector<4x8xf32>
    %c1_61 = arith.constant 1 : index
    %c0_62 = arith.constant 0 : index
    %102 = tpu.strided_load %arg16[%c1_61, %c0_62] {strides = array<i32: 2, 1>} : memref<16x8xf32, #tpu.memory_space<vmem>>, vector<4x8xf32>
    %103 = arith.maximumf %101, %102 : vector<4x8xf32>
    %cst_63 = arith.constant 0.000000e+00 : f32
    %104 = vector.broadcast %cst_63 : f32 to vector<1x8xf32>
    %105 = vector.extract_strided_slice %103 {offsets = [0, 0], sizes = [3, 8], strides = [1, 1]} : vector<4x8xf32> to vector<3x8xf32>
    %106 = tpu.concatenate %104, %105 in 0 : vector<1x8xf32>, vector<3x8xf32> -> vector<4x8xf32>
    %107 = vector.extract_strided_slice %103 {offsets = [1, 0], sizes = [3, 8], strides = [1, 1]} : vector<4x8xf32> to vector<3x8xf32>
    %108 = tpu.concatenate %107, %104 in 0 : vector<3x8xf32>, vector<1x8xf32> -> vector<4x8xf32>
    %c0_64 = arith.constant 0 : index
    %c0_65 = arith.constant 0 : index
    %c0_66 = arith.constant 0 : index
    %109 = vector.load %arg8[%c0_64, %c0_65, %c0_66] : memref<3x8x64xf32, #tpu.memory_space<vmem>>, vector<1x8x64xf32>
    %110 = vector.shape_cast %109 : vector<1x8x64xf32> to vector<8x64xf32>
    %cst_67 = arith.constant dense<0.000000e+00> : vector<4x64xf32>
    %111 = tpu.matmul %106, %110, %cst_67 {dimension_numbers = #tpu.dot_dimension_numbers<[1], [0], [0], [1], [0, 0, 1, 1], [], []>} : vector<4x8xf32>, vector<8x64xf32>, vector<4x64xf32> -> vector<4x64xf32>
    %c1_68 = arith.constant 1 : index
    %c0_69 = arith.constant 0 : index
    %c0_70 = arith.constant 0 : index
    %112 = vector.load %arg8[%c1_68, %c0_69, %c0_70] : memref<3x8x64xf32, #tpu.memory_space<vmem>>, vector<1x8x64xf32>
    %113 = vector.shape_cast %112 : vector<1x8x64xf32> to vector<8x64xf32>
    %cst_71 = arith.constant dense<0.000000e+00> : vector<4x64xf32>
    %114 = tpu.matmul %103, %113, %cst_71 {dimension_numbers = #tpu.dot_dimension_numbers<[1], [0], [0], [1], [0, 0, 1, 1], [], []>} : vector<4x8xf32>, vector<8x64xf32>, vector<4x64xf32> -> vector<4x64xf32>
    %115 = arith.addf %111, %114 : vector<4x64xf32>
    %c2_72 = arith.constant 2 : index
    %c0_73 = arith.constant 0 : index
    %c0_74 = arith.constant 0 : index
    %116 = vector.load %arg8[%c2_72, %c0_73, %c0_74] : memref<3x8x64xf32, #tpu.memory_space<vmem>>, vector<1x8x64xf32>
    %117 = vector.shape_cast %116 : vector<1x8x64xf32> to vector<8x64xf32>
    %cst_75 = arith.constant dense<0.000000e+00> : vector<4x64xf32>
    %118 = tpu.matmul %108, %117, %cst_75 {dimension_numbers = #tpu.dot_dimension_numbers<[1], [0], [0], [1], [0, 0, 1, 1], [], []>} : vector<4x8xf32>, vector<8x64xf32>, vector<4x64xf32> -> vector<4x64xf32>
    %119 = arith.addf %115, %118 : vector<4x64xf32>
    %c0_76 = arith.constant 0 : index
    %c0_77 = arith.constant 0 : index
    %120 = vector.load %arg9[%c0_76, %c0_77] : memref<1x64xf32, #tpu.memory_space<vmem>>, vector<1x64xf32>
    %121 = vector.broadcast %120 : vector<1x64xf32> to vector<4x64xf32>
    %122 = arith.addf %119, %121 : vector<4x64xf32>
    %cst_78 = arith.constant dense<0xFF800000> : vector<64xf32>
    %123 = vector.multi_reduction <maximumf>, %122, %cst_78 [0] : vector<4x64xf32> to vector<64xf32>
    %124 = vector.shape_cast %123 : vector<64xf32> to vector<1x64xf32>
    %c0_79 = arith.constant 0 : index
    %c0_80 = arith.constant 0 : index
    %125 = vector.load %arg10[%c0_79, %c0_80] : memref<64x32xf32, #tpu.memory_space<vmem>>, vector<64x32xf32>
    %cst_81 = arith.constant dense<0.000000e+00> : vector<1x32xf32>
    %126 = tpu.matmul %124, %125, %cst_81 {dimension_numbers = #tpu.dot_dimension_numbers<[1], [0], [0], [1], [0, 0, 1, 1], [], []>} : vector<1x64xf32>, vector<64x32xf32>, vector<1x32xf32> -> vector<1x32xf32>
    %c0_82 = arith.constant 0 : index
    %c0_83 = arith.constant 0 : index
    %127 = vector.load %arg13[%c0_82, %c0_83] : memref<2x32xf32, #tpu.memory_space<vmem>>, vector<1x32xf32>
    %128 = arith.addf %126, %127 : vector<1x32xf32>
    %c0_84 = arith.constant 0 : index
    %c0_85 = arith.constant 0 : index
    %129 = vector.load %arg11[%c0_84, %c0_85] : memref<32x32xf32, #tpu.memory_space<vmem>>, vector<32x32xf32>
    %cst_86 = arith.constant dense<0.000000e+00> : vector<1x32xf32>
    %130 = tpu.matmul %128, %129, %cst_86 {dimension_numbers = #tpu.dot_dimension_numbers<[1], [0], [0], [1], [0, 0, 1, 1], [], []>} : vector<1x32xf32>, vector<32x32xf32>, vector<1x32xf32> -> vector<1x32xf32>
    %c1_87 = arith.constant 1 : index
    %c0_88 = arith.constant 0 : index
    %131 = vector.load %arg13[%c1_87, %c0_88] : memref<2x32xf32, #tpu.memory_space<vmem>>, vector<1x32xf32>
    %132 = arith.addf %130, %131 : vector<1x32xf32>
    %c0_89 = arith.constant 0 : index
    %c0_90 = arith.constant 0 : index
    %133 = vector.load %arg12[%c0_89, %c0_90] : memref<32x2xf32, #tpu.memory_space<vmem>>, vector<32x2xf32>
    %cst_91 = arith.constant dense<0.000000e+00> : vector<1x2xf32>
    %134 = tpu.matmul %132, %133, %cst_91 {dimension_numbers = #tpu.dot_dimension_numbers<[1], [0], [0], [1], [0, 0, 1, 1], [], []>} : vector<1x32xf32>, vector<32x2xf32>, vector<1x2xf32> -> vector<1x2xf32>
    %c0_92 = arith.constant 0 : index
    %c0_93 = arith.constant 0 : index
    %135 = vector.load %arg14[%c0_92, %c0_93] : memref<1x2xf32, #tpu.memory_space<vmem>>, vector<1x2xf32>
    %136 = arith.addf %134, %135 : vector<1x2xf32>
    %137 = tpu.iota {dimensions = array<i32: 1>} : vector<1x2xi32>
    %c0_i32 = arith.constant 0 : i32
    %138 = vector.broadcast %c0_i32 : i32 to vector<1x2xi32>
    %139 = arith.cmpi eq, %137, %138 : vector<1x2xi32>
    %140 = arith.negf %136 : vector<1x2xf32>
    %141 = math.exp %140 : vector<1x2xf32>
    %cst_94 = arith.constant 1.000000e+00 : f32
    %142 = vector.broadcast %cst_94 : f32 to vector<1x2xf32>
    %143 = arith.addf %142, %141 : vector<1x2xf32>
    %144 = arith.divf %142, %143 : vector<1x2xf32>
    %145 = arith.select %139, %136, %144 : vector<1x2xi1>, vector<1x2xf32>
    %c0_95 = arith.constant 0 : index
    %c0_96 = arith.constant 0 : index
    %c0_97 = arith.constant 0 : index
    %146 = vector.load %arg15[%c0_95, %c0_96, %c0_97] : memref<1x1x2xf32, #tpu.memory_space<vmem>>, vector<1x1x2xf32>
    %147 = vector.shape_cast %146 : vector<1x1x2xf32> to vector<1x2xf32>
    %148 = vector.shape_cast %145 : vector<1x2xf32> to vector<1x1x2xf32>
    tpu.vector_store %arg15[%c0_95, %c0_96, %c0_97], %148 {strides = array<i32>} : memref<1x1x2xf32, #tpu.memory_space<vmem>>, vector<1x1x2xf32>,
    return
  }
  func.func @transform_0(%arg0: i32) -> (i32, i32, i32) {
    %c0_i32 = arith.constant 0 : i32
    %c0_i32_0 = arith.constant 0 : i32
    %c0_i32_1 = arith.constant 0 : i32
    return %arg0, %c0_i32, %c0_i32_0 : i32, i32, i32
  }
  func.func @transform_1(%arg0: i32) -> (i32, i32, i32) {
    %c0_i32 = arith.constant 0 : i32
    %c0_i32_0 = arith.constant 0 : i32
    %c0_i32_1 = arith.constant 0 : i32
    %c0_i32_2 = arith.constant 0 : i32
    return %c0_i32, %c0_i32_0, %c0_i32_1 : i32, i32, i32
  }
  func.func @transform_2(%arg0: i32) -> (i32, i32) {
    %c0_i32 = arith.constant 0 : i32
    %c0_i32_0 = arith.constant 0 : i32
    %c0_i32_1 = arith.constant 0 : i32
    return %c0_i32, %c0_i32_0 : i32, i32
  }
  func.func @transform_3(%arg0: i32) -> (i32, i32, i32) {
    %c0_i32 = arith.constant 0 : i32
    %c0_i32_0 = arith.constant 0 : i32
    %c0_i32_1 = arith.constant 0 : i32
    %c0_i32_2 = arith.constant 0 : i32
    return %c0_i32, %c0_i32_0, %c0_i32_1 : i32, i32, i32
  }
  func.func @transform_4(%arg0: i32) -> (i32, i32, i32) {
    %c0_i32 = arith.constant 0 : i32
    %c0_i32_0 = arith.constant 0 : i32
    %c0_i32_1 = arith.constant 0 : i32
    %c0_i32_2 = arith.constant 0 : i32
    return %c0_i32, %c0_i32_0, %c0_i32_1 : i32, i32, i32
  }
  func.func @transform_5(%arg0: i32) -> (i32, i32) {
    %c0_i32 = arith.constant 0 : i32
    %c0_i32_0 = arith.constant 0 : i32
    %c0_i32_1 = arith.constant 0 : i32
    return %c0_i32, %c0_i32_0 : i32, i32
  }
  func.func @transform_6(%arg0: i32) -> (i32, i32, i32) {
    %c0_i32 = arith.constant 0 : i32
    %c0_i32_0 = arith.constant 0 : i32
    %c0_i32_1 = arith.constant 0 : i32
    %c0_i32_2 = arith.constant 0 : i32
    return %c0_i32, %c0_i32_0, %c0_i32_1 : i32, i32, i32
  }
  func.func @transform_7(%arg0: i32) -> (i32, i32, i32) {
    %c0_i32 = arith.constant 0 : i32
    %c0_i32_0 = arith.constant 0 : i32
    %c0_i32_1 = arith.constant 0 : i32
    %c0_i32_2 = arith.constant 0 : i32
    return %c0_i32, %c0_i32_0, %c0_i32_1 : i32, i32, i32
  }
  func.func @transform_8(%arg0: i32) -> (i32, i32) {
    %c0_i32 = arith.constant 0 : i32
    %c0_i32_0 = arith.constant 0 : i32
    %c0_i32_1 = arith.constant 0 : i32
    return %c0_i32, %c0_i32_0 : i32, i32
  }
  func.func @transform_9(%arg0: i32) -> (i32, i32) {
    %c0_i32 = arith.constant 0 : i32
    %c0_i32_0 = arith.constant 0 : i32
    %c0_i32_1 = arith.constant 0 : i32
    return %c0_i32, %c0_i32_0 : i32, i32
  }
  func.func @transform_10(%arg0: i32) -> (i32, i32) {
    %c0_i32 = arith.constant 0 : i32
    %c0_i32_0 = arith.constant 0 : i32
    %c0_i32_1 = arith.constant 0 : i32
    return %c0_i32, %c0_i32_0 : i32, i32
  }
  func.func @transform_11(%arg0: i32) -> (i32, i32) {
    %c0_i32 = arith.constant 0 : i32
    %c0_i32_0 = arith.constant 0 : i32
    %c0_i32_1 = arith.constant 0 : i32
    return %c0_i32, %c0_i32_0 : i32, i32
  }
  func.func @transform_12(%arg0: i32) -> (i32, i32) {
    %c0_i32 = arith.constant 0 : i32
    %c0_i32_0 = arith.constant 0 : i32
    %c0_i32_1 = arith.constant 0 : i32
    return %c0_i32, %c0_i32_0 : i32, i32
  }
  func.func @transform_13(%arg0: i32) -> (i32, i32) {
    %c0_i32 = arith.constant 0 : i32
    %c0_i32_0 = arith.constant 0 : i32
    %c0_i32_1 = arith.constant 0 : i32
    return %c0_i32, %c0_i32_0 : i32, i32
  }
  func.func @transform_14(%arg0: i32) -> (i32, i32, i32) {
    %c0_i32 = arith.constant 0 : i32
    %c0_i32_0 = arith.constant 0 : i32
    %c0_i32_1 = arith.constant 0 : i32
    return %arg0, %c0_i32, %c0_i32_0 : i32, i32, i32
  }
}

</mosaic_0001>

<llo_original>
// kernel: tpu_custom_call.1
$region0: #{tpu_custom_call.1}
  #allocation0 [shape = 'u32[]', space=smem, size = 0x4, offset = 0x4, fixed_abs, tag = 'smem constant byte address 0x4 - core index']
  #allocation1 [shape = 'u32[144,128]{1,0:T(1,128)}', space=vmem, size = 0x12000, scoped, tag = 'internal scratch']
  #allocation2 [shape = 'f32[16,8]{1,0:T(8,128)}', space=vmem, size = 0x2000, scoped, tag = 'scratch operand']
  %s0 = inlined_call_operand.vmem [shape: f32[2,16,8], index: 0, kind: input, shape index: {}]
  %s1 = inlined_call_operand.vmem [shape: f32[3,8,8], index: 1, kind: input, shape index: {}]
  %s2 = inlined_call_operand.vmem [shape: f32[1,8], index: 2, kind: input, shape index: {}]
  %s3 = inlined_call_operand.vmem [shape: f32[2,16,8], index: 3, kind: input, shape index: {}]
  %s4 = inlined_call_operand.vmem [shape: f32[3,8,8], index: 4, kind: input, shape index: {}]
  %s5 = inlined_call_operand.vmem [shape: f32[1,8], index: 5, kind: input, shape index: {}]
  %s6 = inlined_call_operand.vmem [shape: f32[2,8,8], index: 6, kind: input, shape index: {}]
  %s7 = inlined_call_operand.vmem [shape: f32[3,8,64], index: 7, kind: input, shape index: {}]
  %s8 = inlined_call_operand.vmem [shape: f32[1,64], index: 8, kind: input, shape index: {}]
  %s9 = inlined_call_operand.vmem [shape: f32[64,32], index: 9, kind: input, shape index: {}]
  %s10 = inlined_call_operand.vmem [shape: f32[32,32], index: 10, kind: input, shape index: {}]
  %s11 = inlined_call_operand.vmem [shape: f32[32,2], index: 11, kind: input, shape index: {}]
  %s12 = inlined_call_operand.vmem [shape: f32[2,32], index: 12, kind: input, shape index: {}]
  %s13 = inlined_call_operand.vmem [shape: f32[1,2], index: 13, kind: input, shape index: {}]
  %s14 = inlined_call_operand.hbm [shape: f32[2,1,2], index: 14, kind: output, shape index: {}]
  %s15 = sld [smem:[#allocation0]]
  $region89: #{tpu_custom_call.1} parent=0
    _
  %s17 = ssub.s32 1, %s15
  %s18 = scalar_select 0, %s17, %s15
  $region1: #{tpu_custom_call.1} parent=0
    #allocation3 [shape = 'u8[1024]{0}', space=vmem, size = 0x400, scoped, tag = 'output window, operand 0']
    #allocation4 [shape = 's32[2]{0}', space=sflag, size = 0x8, scoped, tag = 'scoped memory for tpu_custom_call.1']
    %19 = vsyncpa [#allocation4], 0
    %s20 = scalar_lea.sflag [#allocation4], 1
    %21 = vsyncpa %s20, 0
    loop: start=0, step=1, limit=4
    $region2: #{tpu_custom_call.1} parent=1 // loop_pre_header
      _
    $region3: #{tpu_custom_call.1} parent=1 // loop_header
      %s23 = sphi 0, %s27
      %p24 = scmp.ge.s32.totalorder %s23, 4
      %s33 = sphi 0, %s35
      %s36 = sphi 0, %s33
      %s37 = sphi 0, %s36
      %s53 = sphi 0, %s37
      %s57 = sphi 0, %s57
      %s59 = sphi 0, %s57
      %s60 = sphi 0, %s59
      %s74 = sphi 0, %s60
      %s78 = sphi 0, %s78
      %s80 = sphi 0, %s78
      %s81 = sphi 0, %s80
      %s95 = sphi 0, %s81
      %s99 = sphi 0, %s99
      %s101 = sphi 0, %s99
      %s102 = sphi 0, %s101
      %s116 = sphi 0, %s102
      %s120 = sphi 0, %s120
      %s122 = sphi 0, %s120
      %s123 = sphi 0, %s122
      %s137 = sphi 0, %s123
      %s141 = sphi 0, %s141
      %s143 = sphi 0, %s141
      %s144 = sphi 0, %s143
      %s158 = sphi 0, %s144
      %s162 = sphi 0, %s162
      %s164 = sphi 0, %s162
      %s165 = sphi 0, %s164
      %s179 = sphi 0, %s165
      %s183 = sphi 0, %s183
      %s185 = sphi 0, %s183
      %s186 = sphi 0, %s185
      %s200 = sphi 0, %s186
      %s204 = sphi 0, %s204
      %s206 = sphi 0, %s204
      %s207 = sphi 0, %s206
      %s221 = sphi 0, %s207
      %s225 = sphi 0, %s225
      %s227 = sphi 0, %s225
      %s228 = sphi 0, %s227
      %s242 = sphi 0, %s228
      %s246 = sphi 0, %s246
      %s248 = sphi 0, %s246
      %s249 = sphi 0, %s248
      %s263 = sphi 0, %s249
      %s267 = sphi 0, %s267
      %s269 = sphi 0, %s267
      %s270 = sphi 0, %s269
      %s284 = sphi 0, %s270
      %s288 = sphi 0, %s288
      %s290 = sphi 0, %s288
      %s291 = sphi 0, %s290
      %s305 = sphi 0, %s291
      %s309 = sphi 0, %s309
      %s311 = sphi 0, %s309
      %s312 = sphi 0, %s311
      %s326 = sphi 0, %s312
      %s332 = sphi 0, %s334
      %s335 = sphi 0, %s332
      %s336 = sphi 0, %s335
      %s352 = sphi 0, %s336
    $region4: #{tpu_custom_call.1} parent=1 // loop_header_branch
      %26 = sbr.rel (%p24) target = $region8
    $region5: #{tpu_custom_call.1} parent=1 // loop_body
      %s28 = ssub.s32 %s23, 1
      %s29 = ssub.s32 %s23, 2
      %s30 = sadd.s32 %s23, 1
      %s31 = ssub.s32 %s23, %s30
      %p32 = scmp.eq.s32.totalorder %s31, 0
      %s34 = sadd.s32 %s33, 1
      %s35 = scalar_select %p32, %s33, %s34
      %p38 = pneg %p32
      %p39 = scmp.eq.s32.totalorder %s23, 1
      %p40 = por %p38, %p39
      %p41 = scmp.ne.s32.totalorder %s33, %s36
      %p42 = scmp.eq.s32.totalorder %s23, 0
      %p43 = por %p41, %p42
      %p44 = scmp.ne.s32.totalorder %s33, %s36
      %p45 = scmp.eq.s32.totalorder %s28, 1
      %p46 = por %p44, %p45
      %p47 = scmp.ne.s32.totalorder %s36, %s37
      %p48 = scmp.eq.s32.totalorder %s28, 0
      %p49 = por %p47, %p48
      %p50 = scmp.ne.s32.totalorder %s36, %s37
      %p51 = scmp.eq.s32.totalorder %s29, 1
      %p52 = por %p50, %p51
      %p54 = scmp.ne.s32.totalorder %s37, %s53
      %p55 = scmp.eq.s32.totalorder %s29, 0
      %p56 = por %p54, %p55
      %s58 = sadd.s32 %s57, 1
      %p61 = scmp.eq.s32.totalorder %s23, 1
      %p62 = scmp.ne.s32.totalorder %s57, %s59
      %p63 = scmp.eq.s32.totalorder %s23, 0
      %p64 = por %p62, %p63
      %p65 = scmp.ne.s32.totalorder %s57, %s59
      %p66 = scmp.eq.s32.totalorder %s28, 1
      %p67 = por %p65, %p66
      %p68 = scmp.ne.s32.totalorder %s59, %s60
      %p69 = scmp.eq.s32.totalorder %s28, 0
      %p70 = por %p68, %p69
      %p71 = scmp.ne.s32.totalorder %s59, %s60
      %p72 = scmp.eq.s32.totalorder %s29, 1
      %p73 = por %p71, %p72
      %p75 = scmp.ne.s32.totalorder %s60, %s74
      %p76 = scmp.eq.s32.totalorder %s29, 0
      %p77 = por %p75, %p76
      %s79 = sadd.s32 %s78, 1
      %p82 = scmp.eq.s32.totalorder %s23, 1
      %p83 = scmp.ne.s32.totalorder %s78, %s80
      %p84 = scmp.eq.s32.totalorder %s23, 0
      %p85 = por %p83, %p84
      %p86 = scmp.ne.s32.totalorder %s78, %s80
      %p87 = scmp.eq.s32.totalorder %s28, 1
      %p88 = por %p86, %p87
      %p89 = scmp.ne.s32.totalorder %s80, %s81
      %p90 = scmp.eq.s32.totalorder %s28, 0
      %p91 = por %p89, %p90
      %p92 = scmp.ne.s32.totalorder %s80, %s81
      %p93 = scmp.eq.s32.totalorder %s29, 1
      %p94 = por %p92, %p93
      %p96 = scmp.ne.s32.totalorder %s81, %s95
      %p97 = scmp.eq.s32.totalorder %s29, 0
      %p98 = por %p96, %p97
      %s100 = sadd.s32 %s99, 1
      %p103 = scmp.eq.s32.totalorder %s23, 1
      %p104 = scmp.ne.s32.totalorder %s99, %s101
      %p105 = scmp.eq.s32.totalorder %s23, 0
      %p106 = por %p104, %p105
      %p107 = scmp.ne.s32.totalorder %s99, %s101
      %p108 = scmp.eq.s32.totalorder %s28, 1
      %p109 = por %p107, %p108
      %p110 = scmp.ne.s32.totalorder %s101, %s102
      %p111 = scmp.eq.s32.totalorder %s28, 0
      %p112 = por %p110, %p111
      %p113 = scmp.ne.s32.totalorder %s101, %s102
      %p114 = scmp.eq.s32.totalorder %s29, 1
      %p115 = por %p113, %p114
      %p117 = scmp.ne.s32.totalorder %s102, %s116
      %p118 = scmp.eq.s32.totalorder %s29, 0
      %p119 = por %p117, %p118
      %s121 = sadd.s32 %s120, 1
      %p124 = scmp.eq.s32.totalorder %s23, 1
      %p125 = scmp.ne.s32.totalorder %s120, %s122
      %p126 = scmp.eq.s32.totalorder %s23, 0
      %p127 = por %p125, %p126
      %p128 = scmp.ne.s32.totalorder %s120, %s122
      %p129 = scmp.eq.s32.totalorder %s28, 1
      %p130 = por %p128, %p129
      %p131 = scmp.ne.s32.totalorder %s122, %s123
      %p132 = scmp.eq.s32.totalorder %s28, 0
      %p133 = por %p131, %p132
      %p134 = scmp.ne.s32.totalorder %s122, %s123
      %p135 = scmp.eq.s32.totalorder %s29, 1
      %p136 = por %p134, %p135
      %p138 = scmp.ne.s32.totalorder %s123, %s137
      %p139 = scmp.eq.s32.totalorder %s29, 0
      %p140 = por %p138, %p139
      %s142 = sadd.s32 %s141, 1
      %p145 = scmp.eq.s32.totalorder %s23, 1
      %p146 = scmp.ne.s32.totalorder %s141, %s143
      %p147 = scmp.eq.s32.totalorder %s23, 0
      %p148 = por %p146, %p147
      %p149 = scmp.ne.s32.totalorder %s141, %s143
      %p150 = scmp.eq.s32.totalorder %s28, 1
      %p151 = por %p149, %p150
      %p152 = scmp.ne.s32.totalorder %s143, %s144
      %p153 = scmp.eq.s32.totalorder %s28, 0
      %p154 = por %p152, %p153
      %p155 = scmp.ne.s32.totalorder %s143, %s144
      %p156 = scmp.eq.s32.totalorder %s29, 1
      %p157 = por %p155, %p156
      %p159 = scmp.ne.s32.totalorder %s144, %s158
      %p160 = scmp.eq.s32.totalorder %s29, 0
      %p161 = por %p159, %p160
      %s163 = sadd.s32 %s162, 1
      %p166 = scmp.eq.s32.totalorder %s23, 1
      %p167 = scmp.ne.s32.totalorder %s162, %s164
      %p168 = scmp.eq.s32.totalorder %s23, 0
      %p169 = por %p167, %p168
      %p170 = scmp.ne.s32.totalorder %s162, %s164
      %p171 = scmp.eq.s32.totalorder %s28, 1
      %p172 = por %p170, %p171
      %p173 = scmp.ne.s32.totalorder %s164, %s165
      %p174 = scmp.eq.s32.totalorder %s28, 0
      %p175 = por %p173, %p174
      %p176 = scmp.ne.s32.totalorder %s164, %s165
      %p177 = scmp.eq.s32.totalorder %s29, 1
      %p178 = por %p176, %p177
      %p180 = scmp.ne.s32.totalorder %s165, %s179
      %p181 = scmp.eq.s32.totalorder %s29, 0
      %p182 = por %p180, %p181
      %s184 = sadd.s32 %s183, 1
      %p187 = scmp.eq.s32.totalorder %s23, 1
      %p188 = scmp.ne.s32.totalorder %s183, %s185
      %p189 = scmp.eq.s32.totalorder %s23, 0
      %p190 = por %p188, %p189
      %p191 = scmp.ne.s32.totalorder %s183, %s185
      %p192 = scmp.eq.s32.totalorder %s28, 1
      %p193 = por %p191, %p192
      %p194 = scmp.ne.s32.totalorder %s185, %s186
      %p195 = scmp.eq.s32.totalorder %s28, 0
      %p196 = por %p194, %p195
      %p197 = scmp.ne.s32.totalorder %s185, %s186
      %p198 = scmp.eq.s32.totalorder %s29, 1
      %p199 = por %p197, %p198
      %p201 = scmp.ne.s32.totalorder %s186, %s200
      %p202 = scmp.eq.s32.totalorder %s29, 0
      %p203 = por %p201, %p202
      %s205 = sadd.s32 %s204, 1
      %p208 = scmp.eq.s32.totalorder %s23, 1
      %p209 = scmp.ne.s32.totalorder %s204, %s206
      %p210 = scmp.eq.s32.totalorder %s23, 0
      %p211 = por %p209, %p210
      %p212 = scmp.ne.s32.totalorder %s204, %s206
      %p213 = scmp.eq.s32.totalorder %s28, 1
      %p214 = por %p212, %p213
      %p215 = scmp.ne.s32.totalorder %s206, %s207
      %p216 = scmp.eq.s32.totalorder %s28, 0
      %p217 = por %p215, %p216
      %p218 = scmp.ne.s32.totalorder %s206, %s207
      %p219 = scmp.eq.s32.totalorder %s29, 1
      %p220 = por %p218, %p219
      %p222 = scmp.ne.s32.totalorder %s207, %s221
      %p223 = scmp.eq.s32.totalorder %s29, 0
      %p224 = por %p222, %p223
      %s226 = sadd.s32 %s225, 1
      %p229 = scmp.eq.s32.totalorder %s23, 1
      %p230 = scmp.ne.s32.totalorder %s225, %s227
      %p231 = scmp.eq.s32.totalorder %s23, 0
      %p232 = por %p230, %p231
      %p233 = scmp.ne.s32.totalorder %s225, %s227
      %p234 = scmp.eq.s32.totalorder %s28, 1
      %p235 = por %p233, %p234
      %p236 = scmp.ne.s32.totalorder %s227, %s228
      %p237 = scmp.eq.s32.totalorder %s28, 0
      %p238 = por %p236, %p237
      %p239 = scmp.ne.s32.totalorder %s227, %s228
      %p240 = scmp.eq.s32.totalorder %s29, 1
      %p241 = por %p239, %p240
      %p243 = scmp.ne.s32.totalorder %s228, %s242
      %p244 = scmp.eq.s32.totalorder %s29, 0
      %p245 = por %p243, %p244
      %s247 = sadd.s32 %s246, 1
      %p250 = scmp.eq.s32.totalorder %s23, 1
      %p251 = scmp.ne.s32.totalorder %s246, %s248
      %p252 = scmp.eq.s32.totalorder %s23, 0
      %p253 = por %p251, %p252
      %p254 = scmp.ne.s32.totalorder %s246, %s248
      %p255 = scmp.eq.s32.totalorder %s28, 1
      %p256 = por %p254, %p255
      %p257 = scmp.ne.s32.totalorder %s248, %s249
      %p258 = scmp.eq.s32.totalorder %s28, 0
      %p259 = por %p257, %p258
      %p260 = scmp.ne.s32.totalorder %s248, %s249
      %p261 = scmp.eq.s32.totalorder %s29, 1
      %p262 = por %p260, %p261
      %p264 = scmp.ne.s32.totalorder %s249, %s263
      %p265 = scmp.eq.s32.totalorder %s29, 0
      %p266 = por %p264, %p265
      %s268 = sadd.s32 %s267, 1
      %p271 = scmp.eq.s32.totalorder %s23, 1
      %p272 = scmp.ne.s32.totalorder %s267, %s269
      %p273 = scmp.eq.s32.totalorder %s23, 0
      %p274 = por %p272, %p273
      %p275 = scmp.ne.s32.totalorder %s267, %s269
      %p276 = scmp.eq.s32.totalorder %s28, 1
      %p277 = por %p275, %p276
      %p278 = scmp.ne.s32.totalorder %s269, %s270
      %p279 = scmp.eq.s32.totalorder %s28, 0
      %p280 = por %p278, %p279
      %p281 = scmp.ne.s32.totalorder %s269, %s270
      %p282 = scmp.eq.s32.totalorder %s29, 1
      %p283 = por %p281, %p282
      %p285 = scmp.ne.s32.totalorder %s270, %s284
      %p286 = scmp.eq.s32.totalorder %s29, 0
      %p287 = por %p285, %p286
      %s289 = sadd.s32 %s288, 1
      %p292 = scmp.eq.s32.totalorder %s23, 1
      %p293 = scmp.ne.s32.totalorder %s288, %s290
      %p294 = scmp.eq.s32.totalorder %s23, 0
      %p295 = por %p293, %p294
      %p296 = scmp.ne.s32.totalorder %s288, %s290
      %p297 = scmp.eq.s32.totalorder %s28, 1
      %p298 = por %p296, %p297
      %p299 = scmp.ne.s32.totalorder %s290, %s291
      %p300 = scmp.eq.s32.totalorder %s28, 0
      %p301 = por %p299, %p300
      %p302 = scmp.ne.s32.totalorder %s290, %s291
      %p303 = scmp.eq.s32.totalorder %s29, 1
      %p304 = por %p302, %p303
      %p306 = scmp.ne.s32.totalorder %s291, %s305
      %p307 = scmp.eq.s32.totalorder %s29, 0
      %p308 = por %p306, %p307
      %s310 = sadd.s32 %s309, 1
      %p313 = scmp.eq.s32.totalorder %s23, 1
      %p314 = scmp.ne.s32.totalorder %s309, %s311
      %p315 = scmp.eq.s32.totalorder %s23, 0
      %p316 = por %p314, %p315
      %p317 = scmp.ne.s32.totalorder %s309, %s311
      %p318 = scmp.eq.s32.totalorder %s28, 1
      %p319 = por %p317, %p318
      %p320 = scmp.ne.s32.totalorder %s311, %s312
      %p321 = scmp.eq.s32.totalorder %s28, 0
      %p322 = por %p320, %p321
      %p323 = scmp.ne.s32.totalorder %s311, %s312
      %p324 = scmp.eq.s32.totalorder %s29, 1
      %p325 = por %p323, %p324
      %p327 = scmp.ne.s32.totalorder %s312, %s326
      %p328 = scmp.eq.s32.totalorder %s29, 0
      %p329 = por %p327, %p328
      %s330 = ssub.s32 %s23, %s30
      %p331 = scmp.eq.s32.totalorder %s330, 0
      %s333 = sadd.s32 %s332, 1
      %s334 = scalar_select %p331, %s332, %s333
      %p337 = pneg %p331
      %p338 = scmp.eq.s32.totalorder %s23, 1
      %p339 = por %p337, %p338
      %p340 = scmp.ne.s32.totalorder %s332, %s335
      %p341 = scmp.eq.s32.totalorder %s23, 0
      %p342 = por %p340, %p341
      %p343 = scmp.ne.s32.totalorder %s332, %s335
      %p344 = scmp.eq.s32.totalorder %s28, 1
      %p345 = por %p343, %p344
      %p346 = scmp.ne.s32.totalorder %s335, %s336
      %p347 = scmp.eq.s32.totalorder %s28, 0
      %p348 = por %p346, %p347
      %p349 = scmp.ne.s32.totalorder %s335, %s336
      %p350 = scmp.eq.s32.totalorder %s29, 1
      %p351 = por %p349, %p350
      %p353 = scmp.ne.s32.totalorder %s336, %s352
      %p354 = scmp.eq.s32.totalorder %s29, 0
      %p355 = por %p353, %p354
      %p356 = scmp.le.s32.totalorder 1, %s23
      %p357 = scmp.lt.s32.totalorder %s23, 3
      %p358 = pnand %p356, %p357
      %p359 = pneg %p358
      // Predicated region
      $region9: #{tpu_custom_call.1} parent=5 // pred_check
        _
      $region10: #{tpu_custom_call.1} parent=5 // pred_check_branch
        %361 = sbr.rel (%p358) target = $region12
      $region11: #{tpu_custom_call.1} parent=5 // pred_region
        %s362 = ssub.s32 %s23, 1
        // Predicated region
        $region13: #{tpu_custom_call.1} parent=11 // pred_check
          %p363 = pneg %p70
        $region14: #{tpu_custom_call.1} parent=11 // pred_check_branch
          %365 = sbr.rel (%p363) target = $region16
        $region15: #{tpu_custom_call.1} parent=11 // pred_region
          _
        $region16: #{tpu_custom_call.1} parent=11 // pred_fallthru
          _
        // Predicated region
        $region17: #{tpu_custom_call.1} parent=11 // pred_check
          %p366 = pneg %p91
        $region18: #{tpu_custom_call.1} parent=11 // pred_check_branch
          %368 = sbr.rel (%p366) target = $region20
        $region19: #{tpu_custom_call.1} parent=11 // pred_region
          _
        $region20: #{tpu_custom_call.1} parent=11 // pred_fallthru
          _
        // Predicated region
        $region21: #{tpu_custom_call.1} parent=11 // pred_check
          %p369 = pneg %p112
        $region22: #{tpu_custom_call.1} parent=11 // pred_check_branch
          %371 = sbr.rel (%p369) target = $region24
        $region23: #{tpu_custom_call.1} parent=11 // pred_region
          _
        $region24: #{tpu_custom_call.1} parent=11 // pred_fallthru
          _
        // Predicated region
        $region25: #{tpu_custom_call.1} parent=11 // pred_check
          %p372 = pneg %p133
        $region26: #{tpu_custom_call.1} parent=11 // pred_check_branch
          %374 = sbr.rel (%p372) target = $region28
        $region27: #{tpu_custom_call.1} parent=11 // pred_region
          _
        $region28: #{tpu_custom_call.1} parent=11 // pred_fallthru
          _
        // Predicated region
        $region29: #{tpu_custom_call.1} parent=11 // pred_check
          %p375 = pneg %p154
        $region30: #{tpu_custom_call.1} parent=11 // pred_check_branch
          %377 = sbr.rel (%p375) target = $region32
        $region31: #{tpu_custom_call.1} parent=11 // pred_region
          _
        $region32: #{tpu_custom_call.1} parent=11 // pred_fallthru
          _
        // Predicated region
        $region33: #{tpu_custom_call.1} parent=11 // pred_check
          %p378 = pneg %p175
        $region34: #{tpu_custom_call.1} parent=11 // pred_check_branch
          %380 = sbr.rel (%p378) target = $region36
        $region35: #{tpu_custom_call.1} parent=11 // pred_region
          _
        $region36: #{tpu_custom_call.1} parent=11 // pred_fallthru
          _
        // Predicated region
        $region37: #{tpu_custom_call.1} parent=11 // pred_check
          %p381 = pneg %p196
        $region38: #{tpu_custom_call.1} parent=11 // pred_check_branch
          %383 = sbr.rel (%p381) target = $region40
        $region39: #{tpu_custom_call.1} parent=11 // pred_region
          _
        $region40: #{tpu_custom_call.1} parent=11 // pred_fallthru
          _
        // Predicated region
        $region41: #{tpu_custom_call.1} parent=11 // pred_check
          %p384 = pneg %p217
        $region42: #{tpu_custom_call.1} parent=11 // pred_check_branch
          %386 = sbr.rel (%p384) target = $region44
        $region43: #{tpu_custom_call.1} parent=11 // pred_region
          _
        $region44: #{tpu_custom_call.1} parent=11 // pred_fallthru
          _
        // Predicated region
        $region45: #{tpu_custom_call.1} parent=11 // pred_check
          %p387 = pneg %p238
        $region46: #{tpu_custom_call.1} parent=11 // pred_check_branch
          %389 = sbr.rel (%p387) target = $region48
        $region47: #{tpu_custom_call.1} parent=11 // pred_region
          _
        $region48: #{tpu_custom_call.1} parent=11 // pred_fallthru
          _
        // Predicated region
        $region49: #{tpu_custom_call.1} parent=11 // pred_check
          %p390 = pneg %p259
        $region50: #{tpu_custom_call.1} parent=11 // pred_check_branch
          %392 = sbr.rel (%p390) target = $region52
        $region51: #{tpu_custom_call.1} parent=11 // pred_region
          _
        $region52: #{tpu_custom_call.1} parent=11 // pred_fallthru
          _
        // Predicated region
        $region53: #{tpu_custom_call.1} parent=11 // pred_check
          %p393 = pneg %p280
        $region54: #{tpu_custom_call.1} parent=11 // pred_check_branch
          %395 = sbr.rel (%p393) target = $region56
        $region55: #{tpu_custom_call.1} parent=11 // pred_region
          _
        $region56: #{tpu_custom_call.1} parent=11 // pred_fallthru
          _
        // Predicated region
        $region57: #{tpu_custom_call.1} parent=11 // pred_check
          %p396 = pneg %p301
        $region58: #{tpu_custom_call.1} parent=11 // pred_check_branch
          %398 = sbr.rel (%p396) target = $region60
        $region59: #{tpu_custom_call.1} parent=11 // pred_region
          _
        $region60: #{tpu_custom_call.1} parent=11 // pred_fallthru
          _
        // Predicated region
        $region61: #{tpu_custom_call.1} parent=11 // pred_check
          %p399 = pneg %p322
        $region62: #{tpu_custom_call.1} parent=11 // pred_check_branch
          %401 = sbr.rel (%p399) target = $region64
        $region63: #{tpu_custom_call.1} parent=11 // pred_region
          _
        $region64: #{tpu_custom_call.1} parent=11 // pred_fallthru
          _
      $region12: #{tpu_custom_call.1} parent=5 // pred_fallthru
        _
      %p402 = scmp.lt.s32.totalorder %s23, 2
      // Predicated region
      $region65: #{tpu_custom_call.1} parent=5 // pred_check
        %p403 = pneg %p402
      $region66: #{tpu_custom_call.1} parent=5 // pred_check_branch
        %405 = sbr.rel (%p403) target = $region68
      $region67: #{tpu_custom_call.1} parent=5 // pred_region
        // Predicated region
        $region69: #{tpu_custom_call.1} parent=67 // pred_check
          %p406 = pneg %p43
        $region70: #{tpu_custom_call.1} parent=67 // pred_check_branch
          %408 = sbr.rel (%p406) target = $region72
        $region71: #{tpu_custom_call.1} parent=67 // pred_region
          %p409 = scmp.lt.s32.totalorder %s23, 1
          %s410 = scalar_select %p409, %s23, 1
          %s411 = smul.addr %s410, 2
          %s412 = smul.addr %s411, 8
          %s413 = scalar_lea.vmem %s0, %s412
        $region72: #{tpu_custom_call.1} parent=67 // pred_fallthru
          _
      $region68: #{tpu_custom_call.1} parent=5 // pred_fallthru
        _
      %p414 = scmp.le.s32.totalorder 1, %s23
      %p415 = scmp.lt.s32.totalorder %s23, 3
      %p416 = pnand %p414, %p415
      %p417 = pneg %p416
      // Predicated region
      $region73: #{tpu_custom_call.1} parent=5 // pred_check
        _
      $region74: #{tpu_custom_call.1} parent=5 // pred_check_branch
        %419 = sbr.rel (%p416) target = $region76
      $region75: #{tpu_custom_call.1} parent=5 // pred_region
        %s420 = ssub.s32 %s23, 1
        %p421 = scmp.lt.s32.totalorder %s28, 1
        %s422 = scalar_select %p421, %s28, 1
        %s423 = smul.addr %s422, 2
        %s424 = smul.addr %s423, 8
        %s425 = scalar_lea.vmem %s0, %s424
        %p426 = pneg %p49
        %p427 = pneg %p46
        %p428 = pneg %p70
        %p429 = pneg %p67
        %p430 = pneg %p91
        %p431 = pneg %p88
        %p432 = pneg %p112
        %p433 = pneg %p109
        %p434 = pneg %p133
        %p435 = pneg %p130
        %p436 = pneg %p154
        %p437 = pneg %p151
        %p438 = pneg %p175
        %p439 = pneg %p172
        %p440 = pneg %p196
        %p441 = pneg %p193
        %p442 = pneg %p217
        %p443 = pneg %p214
        %p444 = pneg %p238
        %p445 = pneg %p235
        %p446 = pneg %p259
        %p447 = pneg %p256
        %p448 = pneg %p280
        %p449 = pneg %p277
        %p450 = pneg %p301
        %p451 = pneg %p298
        %p452 = pneg %p322
        %p453 = pneg %p319
        %p454 = pneg %p348
        %p455 = pneg %p345
        %s456 = sand.u32 %s335, 1
        %s457 = scalar_lea.sflag [#allocation4], %s456
        %s458 = sand.u32 %s335, 1
        %s459 = scalar_lea.vmem [#allocation3], %s458
        %p460 = scmp.lt.s32.totalorder %s28, 1
        %s461 = scalar_select %p460, %s28, 1
        %s462 = smul.addr %s461, 2
        %s463 = smul.addr %s462, 8
        %s464 = scalar_lea.vmem %s0, %s463
        %v465 = vld [vmem:[%s464] sm:$0xff]
        %v466 = vld [vmem:[%s464 + $0x8] sm:$0xff]
        %vm469 = vcmask 1040384
        %v470 = vrot.slane %v465, 7
        %v471 = vrot.slane %v466, 7
        %v472 = vsel %vm469, %v470, %v471
        %v474 = vsel %vm469, 0.0, %v470
        %vm475 = vcmask 1046528
        %v476 = vrot.slane %v465, 1
        %v477 = vrot.slane %v466, 1
        %v478 = vsel %vm475, %v476, %v477
        %v480 = vsel %vm475, %v477, 0.0
        %v481 = vld [vmem:[%s1] sm:$0xff]
        %s482 = scalar_lea.vmem %s1, 8
        %v483 = vld [vmem:[%s482] sm:$0xff]
        %vm484 = vcmask 64512
        %v485 = vsel %vm484, %v465, 0
        %v487 = vsel %vm484, %v466, 0
        %489 = vmatprep.subr.mxu0 0.0
        %490 = vmatpush1.msra.mxu0 %v483
        %491 = vmatprep.subr.mxu0 0.0
        %492 = vmatpush1.msra.mxu0 0.0
        %493 = vmatprep.subr.mxu0 0.0
        %494 = vmatpush1.msra.mxu0 0.0
        %495 = vmatprep.subr.mxu0 0.0
        %496 = vmatpush1.msra.mxu0 0.0
        %497 = vmatprep.subr.mxu0 0.0
        %498 = vmatpush1.msra.mxu0 0.0
        %499 = vmatprep.subr.mxu0 0.0
        %500 = vmatpush1.msra.mxu0 0.0
        %501 = vmatprep.subr.mxu0 0.0
        %502 = vmatpush1.msra.mxu0 0.0
        %503 = vmatprep.subr.mxu0 0.0
        %504 = vmatpush1.msra.mxu0 0.0
        %505 = vmatprep.subr.mxu0 0.0
        %506 = vmatpush1.msra.mxu0 0.0
        %507 = vmatprep.subr.mxu0 0.0
        %508 = vmatpush1.msra.mxu0 0.0
        %509 = vmatprep.subr.mxu0 0.0
        %510 = vmatpush1.msra.mxu0 0.0
        %511 = vmatprep.subr.mxu0 0.0
        %512 = vmatpush1.msra.mxu0 0.0
        %513 = vmatprep.subr.mxu0 0.0
        %514 = vmatpush1.msra.mxu0 0.0
        %515 = vmatprep.subr.mxu0 0.0
        %516 = vmatpush1.msra.mxu0 0.0
        %517 = vmatprep.subr.mxu0 0.0
        %518 = vmatpush1.msra.mxu0 0.0
        %519 = vmatprep.subr.mxu0 0.0
        %520 = vmatpush1.msra.mxu0 0.0
        %521 = vmatprep.subr.mxu0 0.0
        %522 = vmatpush1.msra.mxu0 0.0
        %523 = vmatprep.subr.mxu0 0.0
        %524 = vmatpush1.msra.mxu0 0.0
        %525 = vmatprep.subr.mxu0 0.0
        %526 = vmatpush1.msra.mxu0 0.0
        %527 = vmatprep.subr.mxu0 0.0
        %528 = vmatpush1.msra.mxu0 0.0
        %529 = vmatprep.subr.mxu0 0.0
        %530 = vmatpush1.msra.mxu0 0.0
        %531 = vmatprep.subr.mxu0 0.0
        %532 = vmatpush1.msra.mxu0 0.0
        %533 = vmatprep.subr.mxu0 0.0
        %534 = vmatpush1.msra.mxu0 0.0
        %535 = vmatprep.subr.mxu0 0.0
        %536 = vmatpush1.msra.mxu0 0.0
        %537 = vmatprep.subr.mxu0 0.0
        %538 = vmatpush1.msra.mxu0 0.0
        %539 = vmatprep.subr.mxu0 0.0
        %540 = vmatpush1.msra.mxu0 0.0
        %541 = vmatprep.subr.mxu0 0.0
        %542 = vmatpush1.msra.mxu0 0.0
        %543 = vmatprep.subr.mxu0 0.0
        %544 = vmatpush1.msra.mxu0 0.0
        %545 = vmatprep.subr.mxu0 0.0
        %546 = vmatpush1.msra.mxu0 0.0
        %547 = vmatprep.subr.mxu0 0.0
        %548 = vmatpush1.msra.mxu0 0.0
        %549 = vmatprep.subr.mxu0 0.0
        %550 = vmatpush1.msra.mxu0 0.0
        %551 = vmatprep.subr.mxu0 0.0
        %552 = vmatpush1.msra.mxu0 0.0
        %553 = vmatprep.mubr.f32.mxu0 0.0
        %554 = vmatmul.mubr.f32.gmra.mrb[0].mxu0 %v485
        %v555 = vpop.f32.mrb[0].mxu0
        %v556 = vadd.f32 0.0, %v555
        %v557 = vpop.f32.mrb[0].mxu0
        %558 = vmatprep.mubr.f32.mxu0 0.0
        %559 = vmatmul.mubr.f32.gmra.mrb[0].mxu0 %v487
        %v560 = vpop.f32.mrb[0].mxu0
        %v561 = vadd.f32 0.0, %v560
        %v562 = vpop.f32.mrb[0].mxu0
        %563 = vdwg.mxu0
        %v565 = vsel %vm484, %v474, 0
        %v567 = vsel %vm484, %v472, 0
        %569 = vmatprep.subr.mxu0 0.0
        %570 = vmatpush1.msra.mxu0 %v481
        %571 = vmatprep.subr.mxu0 0.0
        %572 = vmatpush1.msra.mxu0 0.0
        %573 = vmatprep.subr.mxu0 0.0
        %574 = vmatpush1.msra.mxu0 0.0
        %575 = vmatprep.subr.mxu0 0.0
        %576 = vmatpush1.msra.mxu0 0.0
        %577 = vmatprep.subr.mxu0 0.0
        %578 = vmatpush1.msra.mxu0 0.0
        %579 = vmatprep.subr.mxu0 0.0
        %580 = vmatpush1.msra.mxu0 0.0
        %581 = vmatprep.subr.mxu0 0.0
        %582 = vmatpush1.msra.mxu0 0.0
        %583 = vmatprep.subr.mxu0 0.0
        %584 = vmatpush1.msra.mxu0 0.0
        %585 = vmatprep.subr.mxu0 0.0
        %586 = vmatpush1.msra.mxu0 0.0
        %587 = vmatprep.subr.mxu0 0.0
        %588 = vmatpush1.msra.mxu0 0.0
        %589 = vmatprep.subr.mxu0 0.0
        %590 = vmatpush1.msra.mxu0 0.0
        %591 = vmatprep.subr.mxu0 0.0
        %592 = vmatpush1.msra.mxu0 0.0
        %593 = vmatprep.subr.mxu0 0.0
        %594 = vmatpush1.msra.mxu0 0.0
        %595 = vmatprep.subr.mxu0 0.0
        %596 = vmatpush1.msra.mxu0 0.0
        %597 = vmatprep.subr.mxu0 0.0
        %598 = vmatpush1.msra.mxu0 0.0
        %599 = vmatprep.subr.mxu0 0.0
        %600 = vmatpush1.msra.mxu0 0.0
        %601 = vmatprep.subr.mxu0 0.0
        %602 = vmatpush1.msra.mxu0 0.0
        %603 = vmatprep.subr.mxu0 0.0
        %604 = vmatpush1.msra.mxu0 0.0
        %605 = vmatprep.subr.mxu0 0.0
        %606 = vmatpush1.msra.mxu0 0.0
        %607 = vmatprep.subr.mxu0 0.0
        %608 = vmatpush1.msra.mxu0 0.0
        %609 = vmatprep.subr.mxu0 0.0
        %610 = vmatpush1.msra.mxu0 0.0
        %611 = vmatprep.subr.mxu0 0.0
        %612 = vmatpush1.msra.mxu0 0.0
        %613 = vmatprep.subr.mxu0 0.0
        %614 = vmatpush1.msra.mxu0 0.0
        %615 = vmatprep.subr.mxu0 0.0
        %616 = vmatpush1.msra.mxu0 0.0
        %617 = vmatprep.subr.mxu0 0.0
        %618 = vmatpush1.msra.mxu0 0.0
        %619 = vmatprep.subr.mxu0 0.0
        %620 = vmatpush1.msra.mxu0 0.0
        %621 = vmatprep.subr.mxu0 0.0
        %622 = vmatpush1.msra.mxu0 0.0
        %623 = vmatprep.subr.mxu0 0.0
        %624 = vmatpush1.msra.mxu0 0.0
        %625 = vmatprep.subr.mxu0 0.0
        %626 = vmatpush1.msra.mxu0 0.0
        %627 = vmatprep.subr.mxu0 0.0
        %628 = vmatpush1.msra.mxu0 0.0
        %629 = vmatprep.subr.mxu0 0.0
        %630 = vmatpush1.msra.mxu0 0.0
        %631 = vmatprep.subr.mxu0 0.0
        %632 = vmatpush1.msra.mxu0 0.0
        %633 = vmatprep.mubr.f32.mxu0 0.0
        %634 = vmatmul.mubr.f32.gmra.mrb[0].mxu0 %v565
        %v635 = vpop.f32.mrb[0].mxu0
        %v636 = vadd.f32 %v556, %v635
        %v637 = vpop.f32.mrb[0].mxu0
        %638 = vmatprep.mubr.f32.mxu0 0.0
        %639 = vmatmul.mubr.f32.gmra.mrb[0].mxu0 %v567
        %v640 = vpop.f32.mrb[0].mxu0
        %v641 = vadd.f32 %v561, %v640
        %v642 = vpop.f32.mrb[0].mxu0
        %643 = vdwg.mxu0
        %s644 = scalar_lea.vmem %s1, 16
        %v645 = vld [vmem:[%s644] sm:$0xff]
        %v646 = vsel %vm484, %v478, 0
        %v649 = vsel %vm484, %v480, 0
        %651 = vmatprep.subr.mxu0 0.0
        %652 = vmatpush1.msra.mxu0 %v645
        %653 = vmatprep.subr.mxu0 0.0
        %654 = vmatpush1.msra.mxu0 0.0
        %655 = vmatprep.subr.mxu0 0.0
        %656 = vmatpush1.msra.mxu0 0.0
        %657 = vmatprep.subr.mxu0 0.0
        %658 = vmatpush1.msra.mxu0 0.0
        %659 = vmatprep.subr.mxu0 0.0
        %660 = vmatpush1.msra.mxu0 0.0
        %661 = vmatprep.subr.mxu0 0.0
        %662 = vmatpush1.msra.mxu0 0.0
        %663 = vmatprep.subr.mxu0 0.0
        %664 = vmatpush1.msra.mxu0 0.0
        %665 = vmatprep.subr.mxu0 0.0
        %666 = vmatpush1.msra.mxu0 0.0
        %667 = vmatprep.subr.mxu0 0.0
        %668 = vmatpush1.msra.mxu0 0.0
        %669 = vmatprep.subr.mxu0 0.0
        %670 = vmatpush1.msra.mxu0 0.0
        %671 = vmatprep.subr.mxu0 0.0
        %672 = vmatpush1.msra.mxu0 0.0
        %673 = vmatprep.subr.mxu0 0.0
        %674 = vmatpush1.msra.mxu0 0.0
        %675 = vmatprep.subr.mxu0 0.0
        %676 = vmatpush1.msra.mxu0 0.0
        %677 = vmatprep.subr.mxu0 0.0
        %678 = vmatpush1.msra.mxu0 0.0
        %679 = vmatprep.subr.mxu0 0.0
        %680 = vmatpush1.msra.mxu0 0.0
        %681 = vmatprep.subr.mxu0 0.0
        %682 = vmatpush1.msra.mxu0 0.0
        %683 = vmatprep.subr.mxu0 0.0
        %684 = vmatpush1.msra.mxu0 0.0
        %685 = vmatprep.subr.mxu0 0.0
        %686 = vmatpush1.msra.mxu0 0.0
        %687 = vmatprep.subr.mxu0 0.0
        %688 = vmatpush1.msra.mxu0 0.0
        %689 = vmatprep.subr.mxu0 0.0
        %690 = vmatpush1.msra.mxu0 0.0
        %691 = vmatprep.subr.mxu0 0.0
        %692 = vmatpush1.msra.mxu0 0.0
        %693 = vmatprep.subr.mxu0 0.0
        %694 = vmatpush1.msra.mxu0 0.0
        %695 = vmatprep.subr.mxu0 0.0
        %696 = vmatpush1.msra.mxu0 0.0
        %697 = vmatprep.subr.mxu0 0.0
        %698 = vmatpush1.msra.mxu0 0.0
        %699 = vmatprep.subr.mxu0 0.0
        %700 = vmatpush1.msra.mxu0 0.0
        %701 = vmatprep.subr.mxu0 0.0
        %702 = vmatpush1.msra.mxu0 0.0
        %703 = vmatprep.subr.mxu0 0.0
        %704 = vmatpush1.msra.mxu0 0.0
        %705 = vmatprep.subr.mxu0 0.0
        %706 = vmatpush1.msra.mxu0 0.0
        %707 = vmatprep.subr.mxu0 0.0
        %708 = vmatpush1.msra.mxu0 0.0
        %709 = vmatprep.subr.mxu0 0.0
        %710 = vmatpush1.msra.mxu0 0.0
        %711 = vmatprep.subr.mxu0 0.0
        %712 = vmatpush1.msra.mxu0 0.0
        %713 = vmatprep.subr.mxu0 0.0
        %714 = vmatpush1.msra.mxu0 0.0
        %715 = vmatprep.mubr.f32.mxu0 0.0
        %716 = vmatmul.mubr.f32.gmra.mrb[0].mxu0 %v646
        %v717 = vpop.f32.mrb[0].mxu0
        %v718 = vadd.f32 0.0, %v717
        %v719 = vpop.f32.mrb[0].mxu0
        %720 = vmatprep.mubr.f32.mxu0 0.0
        %721 = vmatmul.mubr.f32.gmra.mrb[0].mxu0 %v649
        %v722 = vpop.f32.mrb[0].mxu0
        %v723 = vadd.f32 0.0, %v722
        %v724 = vpop.f32.mrb[0].mxu0
        %725 = vdwg.mxu0
        %v726 = vadd.f32 %v636, %v718
        %v727 = vadd.f32 %v641, %v723
        %v728 = vld [vmem:[%s2] sm:$0x1]
        %v730 = vlaneseq
        %v731 = vshrl.u32 %v730, 7
        %v732 = vsub.s32 0, %v731
        %v733 = vrot.slane %v728, %v732
        %v735 = vadd.f32 %v726, %v733
        %v736 = vadd.f32 %v727, %v733
        %v737 = vsel %vm484, %v735, 0.0
        %v738 = vsel %vm484, %v736, 0.0
        %v739 = vadd.f32 %v737, %v738
        %740 = vadd.xlane.f32.xlu0 %v739
        %v741 = vpop.xlane.xlu0 %740
        %v742 = vrot.slane %v741, 4
        %v743 = vadd.f32 %v741, %v742
        %v744 = vrot.slane %v743, 2
        %v745 = vadd.f32 %v743, %v744
        %v746 = vrot.slane %v745, 1
        %v747 = vadd.f32 %v745, %v746
        %s748 = vtos %v747
        %v749 = vstv %s748
        %v750 = vmul.f32 %v749, 0.0078125
        %v751 = vsub.f32 %v735, %v750
        %v752 = vsub.f32 %v736, %v750
        %v753 = vmul.f32 %v751, %v751
        %v754 = vmul.f32 %v752, %v752
        %v755 = vsel %vm484, %v753, 0.0
        %v756 = vsel %vm484, %v754, 0.0
        %v757 = vadd.f32 %v755, %v756
        %758 = vadd.xlane.f32.xlu0 %v757
        %v759 = vpop.xlane.xlu0 %758
        %v760 = vrot.slane %v759, 4
        %v761 = vadd.f32 %v759, %v760
        %v762 = vrot.slane %v761, 2
        %v763 = vadd.f32 %v761, %v762
        %v764 = vrot.slane %v763, 1
        %v765 = vadd.f32 %v763, %v764
        %s766 = vtos %v765
        %v767 = vstv %s766
        %v768 = vmul.f32 %v767, 0.0078125
        %v769 = vadd.f32 %v768, 1e-05
        %v770 = vrsqrt.pop %v769
        %v771 = vmul.f32 %v751, %v770
        %v772 = vmul.f32 %v752, %v770
        %v773 = vld [vmem:[%s3] sm:$0xff]
        %v774 = vld [vmem:[%s3 + $0x8] sm:$0xff]
        %v775 = vmul.f32 %v771, %v773
        %v776 = vmul.f32 %v772, %v774
        %s777 = scalar_lea.vmem %s3, 16
        %v778 = vld [vmem:[%s777] sm:$0xff]
        %v779 = vld [vmem:[%s777 + $0x8] sm:$0xff]
        %v780 = vadd.f32 %v775, %v778
        %v781 = vadd.f32 %v776, %v779
        %782 = vst.msk [vmem:[#allocation2] sm:$0xff] %vm484, %v780
        %783 = vst.msk [vmem:[#allocation2 + $0x8] sm:$0xff] %vm484, %v781
        %v784 = vld [vmem:[#allocation2] ss:$2 sm:$0xff]
        %s785 = scalar_lea.vmem [#allocation2], 1
        %v786 = vld [vmem:[%s785] ss:$2 sm:$0xff]
        %v787 = vmax.f32 %v784, %v786
        %v789 = vrot.slane %v787, 7
        %v791 = vsel %vm469, 0.0, %v789
        %v792 = vrot.slane %v787, 1
        %v794 = vsel %vm475, %v792, 0.0
        %v795 = vld [vmem:[%s4] sm:$0xff]
        %s796 = scalar_lea.vmem %s4, 8
        %v797 = vld [vmem:[%s796] sm:$0xff]
        %v798 = vsel %vm484, %v787, 0
        %800 = vmatprep.subr.mxu0 0.0
        %801 = vmatpush1.msra.mxu0 %v797
        %802 = vmatprep.subr.mxu0 0.0
        %803 = vmatpush1.msra.mxu0 0.0
        %804 = vmatprep.subr.mxu0 0.0
        %805 = vmatpush1.msra.mxu0 0.0
        %806 = vmatprep.subr.mxu0 0.0
        %807 = vmatpush1.msra.mxu0 0.0
        %808 = vmatprep.subr.mxu0 0.0
        %809 = vmatpush1.msra.mxu0 0.0
        %810 = vmatprep.subr.mxu0 0.0
        %811 = vmatpush1.msra.mxu0 0.0
        %812 = vmatprep.subr.mxu0 0.0
        %813 = vmatpush1.msra.mxu0 0.0
        %814 = vmatprep.subr.mxu0 0.0
        %815 = vmatpush1.msra.mxu0 0.0
        %816 = vmatprep.subr.mxu0 0.0
        %817 = vmatpush1.msra.mxu0 0.0
        %818 = vmatprep.subr.mxu0 0.0
        %819 = vmatpush1.msra.mxu0 0.0
        %820 = vmatprep.subr.mxu0 0.0
        %821 = vmatpush1.msra.mxu0 0.0
        %822 = vmatprep.subr.mxu0 0.0
        %823 = vmatpush1.msra.mxu0 0.0
        %824 = vmatprep.subr.mxu0 0.0
        %825 = vmatpush1.msra.mxu0 0.0
        %826 = vmatprep.subr.mxu0 0.0
        %827 = vmatpush1.msra.mxu0 0.0
        %828 = vmatprep.subr.mxu0 0.0
        %829 = vmatpush1.msra.mxu0 0.0
        %830 = vmatprep.subr.mxu0 0.0
        %831 = vmatpush1.msra.mxu0 0.0
        %832 = vmatprep.subr.mxu0 0.0
        %833 = vmatpush1.msra.mxu0 0.0
        %834 = vmatprep.subr.mxu0 0.0
        %835 = vmatpush1.msra.mxu0 0.0
        %836 = vmatprep.subr.mxu0 0.0
        %837 = vmatpush1.msra.mxu0 0.0
        %838 = vmatprep.subr.mxu0 0.0
        %839 = vmatpush1.msra.mxu0 0.0
        %840 = vmatprep.subr.mxu0 0.0
        %841 = vmatpush1.msra.mxu0 0.0
        %842 = vmatprep.subr.mxu0 0.0
        %843 = vmatpush1.msra.mxu0 0.0
        %844 = vmatprep.subr.mxu0 0.0
        %845 = vmatpush1.msra.mxu0 0.0
        %846 = vmatprep.subr.mxu0 0.0
        %847 = vmatpush1.msra.mxu0 0.0
        %848 = vmatprep.subr.mxu0 0.0
        %849 = vmatpush1.msra.mxu0 0.0
        %850 = vmatprep.subr.mxu0 0.0
        %851 = vmatpush1.msra.mxu0 0.0
        %852 = vmatprep.subr.mxu0 0.0
        %853 = vmatpush1.msra.mxu0 0.0
        %854 = vmatprep.subr.mxu0 0.0
        %855 = vmatpush1.msra.mxu0 0.0
        %856 = vmatprep.subr.mxu0 0.0
        %857 = vmatpush1.msra.mxu0 0.0
        %858 = vmatprep.subr.mxu0 0.0
        %859 = vmatpush1.msra.mxu0 0.0
        %860 = vmatprep.subr.mxu0 0.0
        %861 = vmatpush1.msra.mxu0 0.0
        %862 = vmatprep.subr.mxu0 0.0
        %863 = vmatpush1.msra.mxu0 0.0
        %864 = vmatprep.mubr.f32.mxu0 0.0
        %865 = vmatmul.mubr.f32.gmra.mrb[0].mxu0 %v798
        %v866 = vpop.f32.mrb[0].mxu0
        %v867 = vadd.f32 0.0, %v866
        %v868 = vpop.f32.mrb[0].mxu0
        %869 = vdwg.mxu0
        %v871 = vsel %vm484, %v791, 0
        %873 = vmatprep.subr.mxu0 0.0
        %874 = vmatpush1.msra.mxu0 %v795
        %875 = vmatprep.subr.mxu0 0.0
        %876 = vmatpush1.msra.mxu0 0.0
        %877 = vmatprep.subr.mxu0 0.0
        %878 = vmatpush1.msra.mxu0 0.0
        %879 = vmatprep.subr.mxu0 0.0
        %880 = vmatpush1.msra.mxu0 0.0
        %881 = vmatprep.subr.mxu0 0.0
        %882 = vmatpush1.msra.mxu0 0.0
        %883 = vmatprep.subr.mxu0 0.0
        %884 = vmatpush1.msra.mxu0 0.0
        %885 = vmatprep.subr.mxu0 0.0
        %886 = vmatpush1.msra.mxu0 0.0
        %887 = vmatprep.subr.mxu0 0.0
        %888 = vmatpush1.msra.mxu0 0.0
        %889 = vmatprep.subr.mxu0 0.0
        %890 = vmatpush1.msra.mxu0 0.0
        %891 = vmatprep.subr.mxu0 0.0
        %892 = vmatpush1.msra.mxu0 0.0
        %893 = vmatprep.subr.mxu0 0.0
        %894 = vmatpush1.msra.mxu0 0.0
        %895 = vmatprep.subr.mxu0 0.0
        %896 = vmatpush1.msra.mxu0 0.0
        %897 = vmatprep.subr.mxu0 0.0
        %898 = vmatpush1.msra.mxu0 0.0
        %899 = vmatprep.subr.mxu0 0.0
        %900 = vmatpush1.msra.mxu0 0.0
        %901 = vmatprep.subr.mxu0 0.0
        %902 = vmatpush1.msra.mxu0 0.0
        %903 = vmatprep.subr.mxu0 0.0
        %904 = vmatpush1.msra.mxu0 0.0
        %905 = vmatprep.subr.mxu0 0.0
        %906 = vmatpush1.msra.mxu0 0.0
        %907 = vmatprep.subr.mxu0 0.0
        %908 = vmatpush1.msra.mxu0 0.0
        %909 = vmatprep.subr.mxu0 0.0
        %910 = vmatpush1.msra.mxu0 0.0
        %911 = vmatprep.subr.mxu0 0.0
        %912 = vmatpush1.msra.mxu0 0.0
        %913 = vmatprep.subr.mxu0 0.0
        %914 = vmatpush1.msra.mxu0 0.0
        %915 = vmatprep.subr.mxu0 0.0
        %916 = vmatpush1.msra.mxu0 0.0
        %917 = vmatprep.subr.mxu0 0.0
        %918 = vmatpush1.msra.mxu0 0.0
        %919 = vmatprep.subr.mxu0 0.0
        %920 = vmatpush1.msra.mxu0 0.0
        %921 = vmatprep.subr.mxu0 0.0
        %922 = vmatpush1.msra.mxu0 0.0
        %923 = vmatprep.subr.mxu0 0.0
        %924 = vmatpush1.msra.mxu0 0.0
        %925 = vmatprep.subr.mxu0 0.0
        %926 = vmatpush1.msra.mxu0 0.0
        %927 = vmatprep.subr.mxu0 0.0
        %928 = vmatpush1.msra.mxu0 0.0
        %929 = vmatprep.subr.mxu0 0.0
        %930 = vmatpush1.msra.mxu0 0.0
        %931 = vmatprep.subr.mxu0 0.0
        %932 = vmatpush1.msra.mxu0 0.0
        %933 = vmatprep.subr.mxu0 0.0
        %934 = vmatpush1.msra.mxu0 0.0
        %935 = vmatprep.subr.mxu0 0.0
        %936 = vmatpush1.msra.mxu0 0.0
        %937 = vmatprep.mubr.f32.mxu0 0.0
        %938 = vmatmul.mubr.f32.gmra.mrb[0].mxu0 %v871
        %v939 = vpop.f32.mrb[0].mxu0
        %v940 = vadd.f32 %v867, %v939
        %v941 = vpop.f32.mrb[0].mxu0
        %942 = vdwg.mxu0
        %s943 = scalar_lea.vmem %s4, 16
        %v944 = vld [vmem:[%s943] sm:$0xff]
        %v946 = vsel %vm484, %v794, 0
        %948 = vmatprep.subr.mxu0 0.0
        %949 = vmatpush1.msra.mxu0 %v944
        %950 = vmatprep.subr.mxu0 0.0
        %951 = vmatpush1.msra.mxu0 0.0
        %952 = vmatprep.subr.mxu0 0.0
        %953 = vmatpush1.msra.mxu0 0.0
        %954 = vmatprep.subr.mxu0 0.0
        %955 = vmatpush1.msra.mxu0 0.0
        %956 = vmatprep.subr.mxu0 0.0
        %957 = vmatpush1.msra.mxu0 0.0
        %958 = vmatprep.subr.mxu0 0.0
        %959 = vmatpush1.msra.mxu0 0.0
        %960 = vmatprep.subr.mxu0 0.0
        %961 = vmatpush1.msra.mxu0 0.0
        %962 = vmatprep.subr.mxu0 0.0
        %963 = vmatpush1.msra.mxu0 0.0
        %964 = vmatprep.subr.mxu0 0.0
        %965 = vmatpush1.msra.mxu0 0.0
        %966 = vmatprep.subr.mxu0 0.0
        %967 = vmatpush1.msra.mxu0 0.0
        %968 = vmatprep.subr.mxu0 0.0
        %969 = vmatpush1.msra.mxu0 0.0
        %970 = vmatprep.subr.mxu0 0.0
        %971 = vmatpush1.msra.mxu0 0.0
        %972 = vmatprep.subr.mxu0 0.0
        %973 = vmatpush1.msra.mxu0 0.0
        %974 = vmatprep.subr.mxu0 0.0
        %975 = vmatpush1.msra.mxu0 0.0
        %976 = vmatprep.subr.mxu0 0.0
        %977 = vmatpush1.msra.mxu0 0.0
        %978 = vmatprep.subr.mxu0 0.0
        %979 = vmatpush1.msra.mxu0 0.0
        %980 = vmatprep.subr.mxu0 0.0
        %981 = vmatpush1.msra.mxu0 0.0
        %982 = vmatprep.subr.mxu0 0.0
        %983 = vmatpush1.msra.mxu0 0.0
        %984 = vmatprep.subr.mxu0 0.0
        %985 = vmatpush1.msra.mxu0 0.0
        %986 = vmatprep.subr.mxu0 0.0
        %987 = vmatpush1.msra.mxu0 0.0
        %988 = vmatprep.subr.mxu0 0.0
        %989 = vmatpush1.msra.mxu0 0.0
        %990 = vmatprep.subr.mxu0 0.0
        %991 = vmatpush1.msra.mxu0 0.0
        %992 = vmatprep.subr.mxu0 0.0
        %993 = vmatpush1.msra.mxu0 0.0
        %994 = vmatprep.subr.mxu0 0.0
        %995 = vmatpush1.msra.mxu0 0.0
        %996 = vmatprep.subr.mxu0 0.0
        %997 = vmatpush1.msra.mxu0 0.0
        %998 = vmatprep.subr.mxu0 0.0
        %999 = vmatpush1.msra.mxu0 0.0
        %1000 = vmatprep.subr.mxu0 0.0
        %1001 = vmatpush1.msra.mxu0 0.0
        %1002 = vmatprep.subr.mxu0 0.0
        %1003 = vmatpush1.msra.mxu0 0.0
        %1004 = vmatprep.subr.mxu0 0.0
        %1005 = vmatpush1.msra.mxu0 0.0
        %1006 = vmatprep.subr.mxu0 0.0
        %1007 = vmatpush1.msra.mxu0 0.0
        %1008 = vmatprep.subr.mxu0 0.0
        %1009 = vmatpush1.msra.mxu0 0.0
        %1010 = vmatprep.subr.mxu0 0.0
        %1011 = vmatpush1.msra.mxu0 0.0
        %1012 = vmatprep.mubr.f32.mxu0 0.0
        %1013 = vmatmul.mubr.f32.gmra.mrb[0].mxu0 %v946
        %v1014 = vpop.f32.mrb[0].mxu0
        %v1015 = vadd.f32 0.0, %v1014
        %v1016 = vpop.f32.mrb[0].mxu0
        %1017 = vdwg.mxu0
        %v1018 = vadd.f32 %v940, %v1015
        %v1019 = vld [vmem:[%s5] sm:$0x1]
        %v1021 = vlaneseq
        %v1022 = vshrl.u32 %v1021, 7
        %v1023 = vsub.s32 0, %v1022
        %v1024 = vrot.slane %v1019, %v1023
        %v1026 = vadd.f32 %v1018, %v1024
        %v1027 = vsel %vm484, %v1026, 0.0
        %1028 = vadd.xlane.f32.xlu0 %v1027
        %v1029 = vpop.xlane.xlu0 %1028
        %v1030 = vrot.slane %v1029, 4
        %v1031 = vadd.f32 %v1029, %v1030
        %v1032 = vrot.slane %v1031, 2
        %v1033 = vadd.f32 %v1031, %v1032
        %v1034 = vrot.slane %v1033, 1
        %v1035 = vadd.f32 %v1033, %v1034
        %s1036 = vtos %v1035
        %v1037 = vstv %s1036
        %v1038 = vmul.f32 %v1037, 0.015625
        %v1039 = vsub.f32 %v1026, %v1038
        %v1040 = vmul.f32 %v1039, %v1039
        %v1041 = vsel %vm484, %v1040, 0.0
        %1042 = vadd.xlane.f32.xlu0 %v1041
        %v1043 = vpop.xlane.xlu0 %1042
        %v1044 = vrot.slane %v1043, 4
        %v1045 = vadd.f32 %v1043, %v1044
        %v1046 = vrot.slane %v1045, 2
        %v1047 = vadd.f32 %v1045, %v1046
        %v1048 = vrot.slane %v1047, 1
        %v1049 = vadd.f32 %v1047, %v1048
        %s1050 = vtos %v1049
        %v1051 = vstv %s1050
        %v1052 = vmul.f32 %v1051, 0.015625
        %v1053 = vadd.f32 %v1052, 1e-05
        %v1054 = vrsqrt.pop %v1053
        %v1055 = vmul.f32 %v1039, %v1054
        %v1056 = vld [vmem:[%s6] sm:$0xff]
        %v1057 = vmul.f32 %v1055, %v1056
        %s1058 = scalar_lea.vmem %s6, 8
        %v1059 = vld [vmem:[%s1058] sm:$0xff]
        %v1060 = vadd.f32 %v1057, %v1059
        %1061 = vst.msk [vmem:[#allocation2] sm:$0xff] %vm484, %v1060
        %v1062 = vld [vmem:[#allocation2] ss:$2 sm:$0xf]
        %v1063 = vld [vmem:[%s785] ss:$2 sm:$0xf]
        %v1064 = vmax.f32 %v1062, %v1063
        %v1066 = vrot.slane %v1064, 7
        %v1068 = vsel %vm469, 0.0, %v1066
        %v1069 = vrot.slane %v1064, 1
        %vm1071 = vcmask 1042432
        %v1072 = vsel %vm1071, %v1069, 0.0
        %v1073 = vld [vmem:[%s7] sm:$0xff]
        %s1074 = scalar_lea.vmem %s7, 8
        %v1075 = vld [vmem:[%s1074] sm:$0xff]
        %v1076 = vsel %vm484, %v1064, 0
        %1078 = vmatprep.subr.mxu0 0.0
        %1079 = vmatpush1.msra.mxu0 %v1075
        %1080 = vmatprep.subr.mxu0 0.0
        %1081 = vmatpush1.msra.mxu0 0.0
        %1082 = vmatprep.subr.mxu0 0.0
        %1083 = vmatpush1.msra.mxu0 0.0
        %1084 = vmatprep.subr.mxu0 0.0
        %1085 = vmatpush1.msra.mxu0 0.0
        %1086 = vmatprep.subr.mxu0 0.0
        %1087 = vmatpush1.msra.mxu0 0.0
        %1088 = vmatprep.subr.mxu0 0.0
        %1089 = vmatpush1.msra.mxu0 0.0
        %1090 = vmatprep.subr.mxu0 0.0
        %1091 = vmatpush1.msra.mxu0 0.0
        %1092 = vmatprep.subr.mxu0 0.0
        %1093 = vmatpush1.msra.mxu0 0.0
        %1094 = vmatprep.subr.mxu0 0.0
        %1095 = vmatpush1.msra.mxu0 0.0
        %1096 = vmatprep.subr.mxu0 0.0
        %1097 = vmatpush1.msra.mxu0 0.0
        %1098 = vmatprep.subr.mxu0 0.0
        %1099 = vmatpush1.msra.mxu0 0.0
        %1100 = vmatprep.subr.mxu0 0.0
        %1101 = vmatpush1.msra.mxu0 0.0
        %1102 = vmatprep.subr.mxu0 0.0
        %1103 = vmatpush1.msra.mxu0 0.0
        %1104 = vmatprep.subr.mxu0 0.0
        %1105 = vmatpush1.msra.mxu0 0.0
        %1106 = vmatprep.subr.mxu0 0.0
        %1107 = vmatpush1.msra.mxu0 0.0
        %1108 = vmatprep.subr.mxu0 0.0
        %1109 = vmatpush1.msra.mxu0 0.0
        %1110 = vmatprep.subr.mxu0 0.0
        %1111 = vmatpush1.msra.mxu0 0.0
        %1112 = vmatprep.subr.mxu0 0.0
        %1113 = vmatpush1.msra.mxu0 0.0
        %1114 = vmatprep.subr.mxu0 0.0
        %1115 = vmatpush1.msra.mxu0 0.0
        %1116 = vmatprep.subr.mxu0 0.0
        %1117 = vmatpush1.msra.mxu0 0.0
        %1118 = vmatprep.subr.mxu0 0.0
        %1119 = vmatpush1.msra.mxu0 0.0
        %1120 = vmatprep.subr.mxu0 0.0
        %1121 = vmatpush1.msra.mxu0 0.0
        %1122 = vmatprep.subr.mxu0 0.0
        %1123 = vmatpush1.msra.mxu0 0.0
        %1124 = vmatprep.subr.mxu0 0.0
        %1125 = vmatpush1.msra.mxu0 0.0
        %1126 = vmatprep.subr.mxu0 0.0
        %1127 = vmatpush1.msra.mxu0 0.0
        %1128 = vmatprep.subr.mxu0 0.0
        %1129 = vmatpush1.msra.mxu0 0.0
        %1130 = vmatprep.subr.mxu0 0.0
        %1131 = vmatpush1.msra.mxu0 0.0
        %1132 = vmatprep.subr.mxu0 0.0
        %1133 = vmatpush1.msra.mxu0 0.0
        %1134 = vmatprep.subr.mxu0 0.0
        %1135 = vmatpush1.msra.mxu0 0.0
        %1136 = vmatprep.subr.mxu0 0.0
        %1137 = vmatpush1.msra.mxu0 0.0
        %1138 = vmatprep.subr.mxu0 0.0
        %1139 = vmatpush1.msra.mxu0 0.0
        %1140 = vmatprep.subr.mxu0 0.0
        %1141 = vmatpush1.msra.mxu0 0.0
        %1142 = vmatprep.mubr.f32.mxu0 0.0
        %1143 = vmatmul.mubr.f32.gmra.mrb[0].mxu0 %v1076
        %v1144 = vpop.f32.mrb[0].mxu0
        %v1145 = vadd.f32 0.0, %v1144
        %v1146 = vpop.f32.mrb[0].mxu0
        %1147 = vdwg.mxu0
        %v1149 = vsel %vm484, %v1068, 0
        %1151 = vmatprep.subr.mxu0 0.0
        %1152 = vmatpush1.msra.mxu0 %v1073
        %1153 = vmatprep.subr.mxu0 0.0
        %1154 = vmatpush1.msra.mxu0 0.0
        %1155 = vmatprep.subr.mxu0 0.0
        %1156 = vmatpush1.msra.mxu0 0.0
        %1157 = vmatprep.subr.mxu0 0.0
        %1158 = vmatpush1.msra.mxu0 0.0
        %1159 = vmatprep.subr.mxu0 0.0
        %1160 = vmatpush1.msra.mxu0 0.0
        %1161 = vmatprep.subr.mxu0 0.0
        %1162 = vmatpush1.msra.mxu0 0.0
        %1163 = vmatprep.subr.mxu0 0.0
        %1164 = vmatpush1.msra.mxu0 0.0
        %1165 = vmatprep.subr.mxu0 0.0
        %1166 = vmatpush1.msra.mxu0 0.0
        %1167 = vmatprep.subr.mxu0 0.0
        %1168 = vmatpush1.msra.mxu0 0.0
        %1169 = vmatprep.subr.mxu0 0.0
        %1170 = vmatpush1.msra.mxu0 0.0
        %1171 = vmatprep.subr.mxu0 0.0
        %1172 = vmatpush1.msra.mxu0 0.0
        %1173 = vmatprep.subr.mxu0 0.0
        %1174 = vmatpush1.msra.mxu0 0.0
        %1175 = vmatprep.subr.mxu0 0.0
        %1176 = vmatpush1.msra.mxu0 0.0
        %1177 = vmatprep.subr.mxu0 0.0
        %1178 = vmatpush1.msra.mxu0 0.0
        %1179 = vmatprep.subr.mxu0 0.0
        %1180 = vmatpush1.msra.mxu0 0.0
        %1181 = vmatprep.subr.mxu0 0.0
        %1182 = vmatpush1.msra.mxu0 0.0
        %1183 = vmatprep.subr.mxu0 0.0
        %1184 = vmatpush1.msra.mxu0 0.0
        %1185 = vmatprep.subr.mxu0 0.0
        %1186 = vmatpush1.msra.mxu0 0.0
        %1187 = vmatprep.subr.mxu0 0.0
        %1188 = vmatpush1.msra.mxu0 0.0
        %1189 = vmatprep.subr.mxu0 0.0
        %1190 = vmatpush1.msra.mxu0 0.0
        %1191 = vmatprep.subr.mxu0 0.0
        %1192 = vmatpush1.msra.mxu0 0.0
        %1193 = vmatprep.subr.mxu0 0.0
        %1194 = vmatpush1.msra.mxu0 0.0
        %1195 = vmatprep.subr.mxu0 0.0
        %1196 = vmatpush1.msra.mxu0 0.0
        %1197 = vmatprep.subr.mxu0 0.0
        %1198 = vmatpush1.msra.mxu0 0.0
        %1199 = vmatprep.subr.mxu0 0.0
        %1200 = vmatpush1.msra.mxu0 0.0
        %1201 = vmatprep.subr.mxu0 0.0
        %1202 = vmatpush1.msra.mxu0 0.0
        %1203 = vmatprep.subr.mxu0 0.0
        %1204 = vmatpush1.msra.mxu0 0.0
        %1205 = vmatprep.subr.mxu0 0.0
        %1206 = vmatpush1.msra.mxu0 0.0
        %1207 = vmatprep.subr.mxu0 0.0
        %1208 = vmatpush1.msra.mxu0 0.0
        %1209 = vmatprep.subr.mxu0 0.0
        %1210 = vmatpush1.msra.mxu0 0.0
        %1211 = vmatprep.subr.mxu0 0.0
        %1212 = vmatpush1.msra.mxu0 0.0
        %1213 = vmatprep.subr.mxu0 0.0
        %1214 = vmatpush1.msra.mxu0 0.0
        %1215 = vmatprep.mubr.f32.mxu0 0.0
        %1216 = vmatmul.mubr.f32.gmra.mrb[0].mxu0 %v1149
        %v1217 = vpop.f32.mrb[0].mxu0
        %v1218 = vadd.f32 %v1145, %v1217
        %v1219 = vpop.f32.mrb[0].mxu0
        %1220 = vdwg.mxu0
        %s1221 = scalar_lea.vmem %s7, 16
        %v1222 = vld [vmem:[%s1221] sm:$0xff]
        %v1224 = vsel %vm484, %v1072, 0
        %1226 = vmatprep.subr.mxu0 0.0
        %1227 = vmatpush1.msra.mxu0 %v1222
        %1228 = vmatprep.subr.mxu0 0.0
        %1229 = vmatpush1.msra.mxu0 0.0
        %1230 = vmatprep.subr.mxu0 0.0
        %1231 = vmatpush1.msra.mxu0 0.0
        %1232 = vmatprep.subr.mxu0 0.0
        %1233 = vmatpush1.msra.mxu0 0.0
        %1234 = vmatprep.subr.mxu0 0.0
        %1235 = vmatpush1.msra.mxu0 0.0
        %1236 = vmatprep.subr.mxu0 0.0
        %1237 = vmatpush1.msra.mxu0 0.0
        %1238 = vmatprep.subr.mxu0 0.0
        %1239 = vmatpush1.msra.mxu0 0.0
        %1240 = vmatprep.subr.mxu0 0.0
        %1241 = vmatpush1.msra.mxu0 0.0
        %1242 = vmatprep.subr.mxu0 0.0
        %1243 = vmatpush1.msra.mxu0 0.0
        %1244 = vmatprep.subr.mxu0 0.0
        %1245 = vmatpush1.msra.mxu0 0.0
        %1246 = vmatprep.subr.mxu0 0.0
        %1247 = vmatpush1.msra.mxu0 0.0
        %1248 = vmatprep.subr.mxu0 0.0
        %1249 = vmatpush1.msra.mxu0 0.0
        %1250 = vmatprep.subr.mxu0 0.0
        %1251 = vmatpush1.msra.mxu0 0.0
        %1252 = vmatprep.subr.mxu0 0.0
        %1253 = vmatpush1.msra.mxu0 0.0
        %1254 = vmatprep.subr.mxu0 0.0
        %1255 = vmatpush1.msra.mxu0 0.0
        %1256 = vmatprep.subr.mxu0 0.0
        %1257 = vmatpush1.msra.mxu0 0.0
        %1258 = vmatprep.subr.mxu0 0.0
        %1259 = vmatpush1.msra.mxu0 0.0
        %1260 = vmatprep.subr.mxu0 0.0
        %1261 = vmatpush1.msra.mxu0 0.0
        %1262 = vmatprep.subr.mxu0 0.0
        %1263 = vmatpush1.msra.mxu0 0.0
        %1264 = vmatprep.subr.mxu0 0.0
        %1265 = vmatpush1.msra.mxu0 0.0
        %1266 = vmatprep.subr.mxu0 0.0
        %1267 = vmatpush1.msra.mxu0 0.0
        %1268 = vmatprep.subr.mxu0 0.0
        %1269 = vmatpush1.msra.mxu0 0.0
        %1270 = vmatprep.subr.mxu0 0.0
        %1271 = vmatpush1.msra.mxu0 0.0
        %1272 = vmatprep.subr.mxu0 0.0
        %1273 = vmatpush1.msra.mxu0 0.0
        %1274 = vmatprep.subr.mxu0 0.0
        %1275 = vmatpush1.msra.mxu0 0.0
        %1276 = vmatprep.subr.mxu0 0.0
        %1277 = vmatpush1.msra.mxu0 0.0
        %1278 = vmatprep.subr.mxu0 0.0
        %1279 = vmatpush1.msra.mxu0 0.0
        %1280 = vmatprep.subr.mxu0 0.0
        %1281 = vmatpush1.msra.mxu0 0.0
        %1282 = vmatprep.subr.mxu0 0.0
        %1283 = vmatpush1.msra.mxu0 0.0
        %1284 = vmatprep.subr.mxu0 0.0
        %1285 = vmatpush1.msra.mxu0 0.0
        %1286 = vmatprep.subr.mxu0 0.0
        %1287 = vmatpush1.msra.mxu0 0.0
        %1288 = vmatprep.subr.mxu0 0.0
        %1289 = vmatpush1.msra.mxu0 0.0
        %1290 = vmatprep.mubr.f32.mxu0 0.0
        %1291 = vmatmul.mubr.f32.gmra.mrb[0].mxu0 %v1224
        %v1292 = vpop.f32.mrb[0].mxu0
        %v1293 = vadd.f32 0.0, %v1292
        %v1294 = vpop.f32.mrb[0].mxu0
        %1295 = vdwg.mxu0
        %v1296 = vadd.f32 %v1218, %v1293
        %v1297 = vld [vmem:[%s8] sm:$0x1]
        %v1299 = vlaneseq
        %v1300 = vshrl.u32 %v1299, 7
        %v1301 = vsub.s32 0, %v1300
        %v1302 = vrot.slane %v1297, %v1301
        %v1304 = vadd.f32 %v1296, %v1302
        %vm1305 = vcmask 519168
        %v1306 = vsel %vm1305, %v1304, -inf
        %v1307 = vrot.slane %v1306, 4
        %v1308 = vmax.f32 %v1306, %v1307
        %v1309 = vrot.slane %v1308, 2
        %v1310 = vmax.f32 %v1308, %v1309
        %v1311 = vrot.slane %v1310, 1
        %v1312 = vmax.f32 %v1310, %v1311
        %v1313 = vld [vmem:[%s9] sm:$0xff]
        %v1314 = vld [vmem:[%s9 + $0x8] sm:$0xff]
        %v1315 = vld [vmem:[%s9 + $0x10] sm:$0xff]
        %v1316 = vld [vmem:[%s9 + $0x18] sm:$0xff]
        %v1317 = vld [vmem:[%s9 + $0x20] sm:$0xff]
        %v1318 = vld [vmem:[%s9 + $0x28] sm:$0xff]
        %v1319 = vld [vmem:[%s9 + $0x30] sm:$0xff]
        %v1320 = vld [vmem:[%s9 + $0x38] sm:$0xff]
        %v1321 = vld [vmem:[%s12] sm:$0x1]
        %vm1322 = vcmask 523264
        %v1324 = vsel %vm1322, %v1312, 0
        %1326 = vmatprep.subr.mxu0 0.0
        %1327 = vmatpush1.msra.mxu0 %v1313
        %1328 = vmatprep.subr.mxu0 0.0
        %1329 = vmatpush1.msra.mxu0 %v1314
        %1330 = vmatprep.subr.mxu0 0.0
        %1331 = vmatpush1.msra.mxu0 %v1315
        %1332 = vmatprep.subr.mxu0 0.0
        %1333 = vmatpush1.msra.mxu0 %v1316
        %1334 = vmatprep.subr.mxu0 0.0
        %1335 = vmatpush1.msra.mxu0 %v1317
        %1336 = vmatprep.subr.mxu0 0.0
        %1337 = vmatpush1.msra.mxu0 %v1318
        %1338 = vmatprep.subr.mxu0 0.0
        %1339 = vmatpush1.msra.mxu0 %v1319
        %1340 = vmatprep.subr.mxu0 0.0
        %1341 = vmatpush1.msra.mxu0 %v1320
        %1342 = vmatprep.subr.mxu0 0.0
        %1343 = vmatpush1.msra.mxu0 0.0
        %1344 = vmatprep.subr.mxu0 0.0
        %1345 = vmatpush1.msra.mxu0 0.0
        %1346 = vmatprep.subr.mxu0 0.0
        %1347 = vmatpush1.msra.mxu0 0.0
        %1348 = vmatprep.subr.mxu0 0.0
        %1349 = vmatpush1.msra.mxu0 0.0
        %1350 = vmatprep.subr.mxu0 0.0
        %1351 = vmatpush1.msra.mxu0 0.0
        %1352 = vmatprep.subr.mxu0 0.0
        %1353 = vmatpush1.msra.mxu0 0.0
        %1354 = vmatprep.subr.mxu0 0.0
        %1355 = vmatpush1.msra.mxu0 0.0
        %1356 = vmatprep.subr.mxu0 0.0
        %1357 = vmatpush1.msra.mxu0 0.0
        %1358 = vmatprep.subr.mxu0 0.0
        %1359 = vmatpush1.msra.mxu0 0.0
        %1360 = vmatprep.subr.mxu0 0.0
        %1361 = vmatpush1.msra.mxu0 0.0
        %1362 = vmatprep.subr.mxu0 0.0
        %1363 = vmatpush1.msra.mxu0 0.0
        %1364 = vmatprep.subr.mxu0 0.0
        %1365 = vmatpush1.msra.mxu0 0.0
        %1366 = vmatprep.subr.mxu0 0.0
        %1367 = vmatpush1.msra.mxu0 0.0
        %1368 = vmatprep.subr.mxu0 0.0
        %1369 = vmatpush1.msra.mxu0 0.0
        %1370 = vmatprep.subr.mxu0 0.0
        %1371 = vmatpush1.msra.mxu0 0.0
        %1372 = vmatprep.subr.mxu0 0.0
        %1373 = vmatpush1.msra.mxu0 0.0
        %1374 = vmatprep.subr.mxu0 0.0
        %1375 = vmatpush1.msra.mxu0 0.0
        %1376 = vmatprep.subr.mxu0 0.0
        %1377 = vmatpush1.msra.mxu0 0.0
        %1378 = vmatprep.subr.mxu0 0.0
        %1379 = vmatpush1.msra.mxu0 0.0
        %1380 = vmatprep.subr.mxu0 0.0
        %1381 = vmatpush1.msra.mxu0 0.0
        %1382 = vmatprep.subr.mxu0 0.0
        %1383 = vmatpush1.msra.mxu0 0.0
        %1384 = vmatprep.subr.mxu0 0.0
        %1385 = vmatpush1.msra.mxu0 0.0
        %1386 = vmatprep.subr.mxu0 0.0
        %1387 = vmatpush1.msra.mxu0 0.0
        %1388 = vmatprep.subr.mxu0 0.0
        %1389 = vmatpush1.msra.mxu0 0.0
        %1390 = vmatprep.mubr.f32.mxu0 0.0
        %1391 = vmatmul.mubr.f32.gmra.mrb[0].mxu0 %v1324
        %v1392 = vpop.f32.mrb[0].mxu0
        %v1393 = vadd.f32 %v1321, %v1392
        %v1394 = vpop.f32.mrb[0].mxu0
        %1395 = vdwg.mxu0
        %v1396 = vld [vmem:[%s10] sm:$0xff]
        %v1397 = vld [vmem:[%s10 + $0x8] sm:$0xff]
        %v1398 = vld [vmem:[%s10 + $0x10] sm:$0xff]
        %v1399 = vld [vmem:[%s10 + $0x18] sm:$0xff]
        %v1400 = vld [vmem:[%s12 + $0x1] sm:$0x1]
        %vm1401 = vcmask 261120
        %v1403 = vsel %vm1401, %v1393, 0
        %1405 = vmatprep.subr.mxu0 0.0
        %1406 = vmatpush1.msra.mxu0 %v1396
        %1407 = vmatprep.subr.mxu0 0.0
        %1408 = vmatpush1.msra.mxu0 %v1397
        %1409 = vmatprep.subr.mxu0 0.0
        %1410 = vmatpush1.msra.mxu0 %v1398
        %1411 = vmatprep.subr.mxu0 0.0
        %1412 = vmatpush1.msra.mxu0 %v1399
        %1413 = vmatprep.subr.mxu0 0.0
        %1414 = vmatpush1.msra.mxu0 0.0
        %1415 = vmatprep.subr.mxu0 0.0
        %1416 = vmatpush1.msra.mxu0 0.0
        %1417 = vmatprep.subr.mxu0 0.0
        %1418 = vmatpush1.msra.mxu0 0.0
        %1419 = vmatprep.subr.mxu0 0.0
        %1420 = vmatpush1.msra.mxu0 0.0
        %1421 = vmatprep.subr.mxu0 0.0
        %1422 = vmatpush1.msra.mxu0 0.0
        %1423 = vmatprep.subr.mxu0 0.0
        %1424 = vmatpush1.msra.mxu0 0.0
        %1425 = vmatprep.subr.mxu0 0.0
        %1426 = vmatpush1.msra.mxu0 0.0
        %1427 = vmatprep.subr.mxu0 0.0
        %1428 = vmatpush1.msra.mxu0 0.0
        %1429 = vmatprep.subr.mxu0 0.0
        %1430 = vmatpush1.msra.mxu0 0.0
        %1431 = vmatprep.subr.mxu0 0.0
        %1432 = vmatpush1.msra.mxu0 0.0
        %1433 = vmatprep.subr.mxu0 0.0
        %1434 = vmatpush1.msra.mxu0 0.0
        %1435 = vmatprep.subr.mxu0 0.0
        %1436 = vmatpush1.msra.mxu0 0.0
        %1437 = vmatprep.subr.mxu0 0.0
        %1438 = vmatpush1.msra.mxu0 0.0
        %1439 = vmatprep.subr.mxu0 0.0
        %1440 = vmatpush1.msra.mxu0 0.0
        %1441 = vmatprep.subr.mxu0 0.0
        %1442 = vmatpush1.msra.mxu0 0.0
        %1443 = vmatprep.subr.mxu0 0.0
        %1444 = vmatpush1.msra.mxu0 0.0
        %1445 = vmatprep.subr.mxu0 0.0
        %1446 = vmatpush1.msra.mxu0 0.0
        %1447 = vmatprep.subr.mxu0 0.0
        %1448 = vmatpush1.msra.mxu0 0.0
        %1449 = vmatprep.subr.mxu0 0.0
        %1450 = vmatpush1.msra.mxu0 0.0
        %1451 = vmatprep.subr.mxu0 0.0
        %1452 = vmatpush1.msra.mxu0 0.0
        %1453 = vmatprep.subr.mxu0 0.0
        %1454 = vmatpush1.msra.mxu0 0.0
        %1455 = vmatprep.subr.mxu0 0.0
        %1456 = vmatpush1.msra.mxu0 0.0
        %1457 = vmatprep.subr.mxu0 0.0
        %1458 = vmatpush1.msra.mxu0 0.0
        %1459 = vmatprep.subr.mxu0 0.0
        %1460 = vmatpush1.msra.mxu0 0.0
        %1461 = vmatprep.subr.mxu0 0.0
        %1462 = vmatpush1.msra.mxu0 0.0
        %1463 = vmatprep.subr.mxu0 0.0
        %1464 = vmatpush1.msra.mxu0 0.0
        %1465 = vmatprep.subr.mxu0 0.0
        %1466 = vmatpush1.msra.mxu0 0.0
        %1467 = vmatprep.subr.mxu0 0.0
        %1468 = vmatpush1.msra.mxu0 0.0
        %1469 = vmatprep.mubr.f32.mxu0 0.0
        %1470 = vmatmul.mubr.f32.gmra.mrb[0].mxu0 %v1403
        %v1471 = vpop.f32.mrb[0].mxu0
        %v1472 = vadd.f32 %v1400, %v1471
        %v1473 = vpop.f32.mrb[0].mxu0
        %1474 = vdwg.mxu0
        %v1475 = vld [vmem:[%s11] sm:$0xff]
        %v1476 = vld [vmem:[%s11 + $0x8] sm:$0xff]
        %v1477 = vld [vmem:[%s11 + $0x10] sm:$0xff]
        %v1478 = vld [vmem:[%s11 + $0x18] sm:$0xff]
        %v1479 = vld [vmem:[%s13] sm:$0x1]
        %v1481 = vsel %vm1401, %v1472, 0
        %1483 = vmatprep.subr.mxu0 0.0
        %1484 = vmatpush1.msra.mxu0 %v1475
        %1485 = vmatprep.subr.mxu0 0.0
        %1486 = vmatpush1.msra.mxu0 %v1476
        %1487 = vmatprep.subr.mxu0 0.0
        %1488 = vmatpush1.msra.mxu0 %v1477
        %1489 = vmatprep.subr.mxu0 0.0
        %1490 = vmatpush1.msra.mxu0 %v1478
        %1491 = vmatprep.subr.mxu0 0.0
        %1492 = vmatpush1.msra.mxu0 0.0
        %1493 = vmatprep.subr.mxu0 0.0
        %1494 = vmatpush1.msra.mxu0 0.0
        %1495 = vmatprep.subr.mxu0 0.0
        %1496 = vmatpush1.msra.mxu0 0.0
        %1497 = vmatprep.subr.mxu0 0.0
        %1498 = vmatpush1.msra.mxu0 0.0
        %1499 = vmatprep.subr.mxu0 0.0
        %1500 = vmatpush1.msra.mxu0 0.0
        %1501 = vmatprep.subr.mxu0 0.0
        %1502 = vmatpush1.msra.mxu0 0.0
        %1503 = vmatprep.subr.mxu0 0.0
        %1504 = vmatpush1.msra.mxu0 0.0
        %1505 = vmatprep.subr.mxu0 0.0
        %1506 = vmatpush1.msra.mxu0 0.0
        %1507 = vmatprep.subr.mxu0 0.0
        %1508 = vmatpush1.msra.mxu0 0.0
        %1509 = vmatprep.subr.mxu0 0.0
        %1510 = vmatpush1.msra.mxu0 0.0
        %1511 = vmatprep.subr.mxu0 0.0
        %1512 = vmatpush1.msra.mxu0 0.0
        %1513 = vmatprep.subr.mxu0 0.0
        %1514 = vmatpush1.msra.mxu0 0.0
        %1515 = vmatprep.subr.mxu0 0.0
        %1516 = vmatpush1.msra.mxu0 0.0
        %1517 = vmatprep.subr.mxu0 0.0
        %1518 = vmatpush1.msra.mxu0 0.0
        %1519 = vmatprep.subr.mxu0 0.0
        %1520 = vmatpush1.msra.mxu0 0.0
        %1521 = vmatprep.subr.mxu0 0.0
        %1522 = vmatpush1.msra.mxu0 0.0
        %1523 = vmatprep.subr.mxu0 0.0
        %1524 = vmatpush1.msra.mxu0 0.0
        %1525 = vmatprep.subr.mxu0 0.0
        %1526 = vmatpush1.msra.mxu0 0.0
        %1527 = vmatprep.subr.mxu0 0.0
        %1528 = vmatpush1.msra.mxu0 0.0
        %1529 = vmatprep.subr.mxu0 0.0
        %1530 = vmatpush1.msra.mxu0 0.0
        %1531 = vmatprep.subr.mxu0 0.0
        %1532 = vmatpush1.msra.mxu0 0.0
        %1533 = vmatprep.subr.mxu0 0.0
        %1534 = vmatpush1.msra.mxu0 0.0
        %1535 = vmatprep.subr.mxu0 0.0
        %1536 = vmatpush1.msra.mxu0 0.0
        %1537 = vmatprep.subr.mxu0 0.0
        %1538 = vmatpush1.msra.mxu0 0.0
        %1539 = vmatprep.subr.mxu0 0.0
        %1540 = vmatpush1.msra.mxu0 0.0
        %1541 = vmatprep.subr.mxu0 0.0
        %1542 = vmatpush1.msra.mxu0 0.0
        %1543 = vmatprep.subr.mxu0 0.0
        %1544 = vmatpush1.msra.mxu0 0.0
        %1545 = vmatprep.subr.mxu0 0.0
        %1546 = vmatpush1.msra.mxu0 0.0
        %1547 = vmatprep.mubr.f32.mxu0 0.0
        %1548 = vmatmul.mubr.f32.gmra.mrb[0].mxu0 %v1481
        %v1549 = vpop.f32.mrb[0].mxu0
        %v1550 = vadd.f32 %v1479, %v1549
        %v1551 = vpop.f32.mrb[0].mxu0
        %1552 = vdwg.mxu0
        %v1553 = vlaneseq
        %v1554 = vand.u32 %v1553, 127
        %vm1555 = vcmp.eq.s32.totalorder %v1554, 0
        %v1556 = vxor.u32 %v1550, 2147483648
        %v1557 = vmul.f32 %v1556, 1.442695
        %v1558 = vpow.pop %v1557
        %v1559 = vadd.f32 %v1558, 1.0
        %v1560 = vrcp.pop %v1559
        %v1561 = vmul.f32 1.0, %v1560
        %v1562 = vsel %vm1555, %v1550, %v1561
        %vm1563 = vcmask 8192
        %1564 = vst.msk [vmem:[%s459] sm:$0x1] %vm1563, %v1562
        %s1565 = sand.u32 %s335, 1
        %s1566 = scalar_lea.sflag [#allocation4], %s1565
        %s1567 = sand.u32 %s335, 1
        %s1568 = scalar_lea.vmem [#allocation3], %s1567
        // Predicated region
        $region77: #{tpu_custom_call.1} parent=75 // pred_check
          %p1569 = pneg %p345
        $region78: #{tpu_custom_call.1} parent=75 // pred_check_branch
          %1571 = sbr.rel (%p1569) target = $region80
        $region79: #{tpu_custom_call.1} parent=75 // pred_region
          %s1573 = ssub.s32 16, 16
          %1574 = vsyncadd %s1566, %s1573
          %s1575 = smul.addr %s28, 16
          %s1576 = scalar_lea.hbm %s14, %s1575
          %s1578 = sshll.u32 %s1568, 4
          %s1579 = int_to_ptr.vmem [resolvable:$true] %s1578
          %1581 = dma.vmem_to_hbm [thread:$0]  %s1579, 16, %s1576, %s1566
        $region80: #{tpu_custom_call.1} parent=75 // pred_fallthru
          _
      $region76: #{tpu_custom_call.1} parent=5 // pred_fallthru
        _
      %p1582 = scmp.le.s32.totalorder 2, %s23
      // Predicated region
      $region81: #{tpu_custom_call.1} parent=5 // pred_check
        %p1583 = pneg %p1582
      $region82: #{tpu_custom_call.1} parent=5 // pred_check_branch
        %1585 = sbr.rel (%p1583) target = $region84
      $region83: #{tpu_custom_call.1} parent=5 // pred_region
        %s1586 = ssub.s32 %s23, 2
        // Predicated region
        $region85: #{tpu_custom_call.1} parent=83 // pred_check
          %p1587 = pneg %p351
        $region86: #{tpu_custom_call.1} parent=83 // pred_check_branch
          %1589 = sbr.rel (%p1587) target = $region88
        $region87: #{tpu_custom_call.1} parent=83 // pred_region
          %s1590 = sand.u32 %s336, 1
          %s1591 = scalar_lea.sflag [#allocation4], %s1590
          %s1592 = sand.u32 %s336, 1
          %s1593 = scalar_lea.vmem [#allocation3], %s1592
          %1594 = dma.done %s1591, 16
        $region88: #{tpu_custom_call.1} parent=83 // pred_fallthru
          _
      $region84: #{tpu_custom_call.1} parent=5 // pred_fallthru
        _
    $region6: #{tpu_custom_call.1} parent=1 // loop_footer
      %s27 = sadd.s32 1, %s23
    $region7: #{tpu_custom_call.1} parent=1 // loop_footer_branch
      %22 = sbr.rel target = $region3
    $region8: #{tpu_custom_call.1} parent=1 // loop_exit
      _
    %1595 = vsyncpa [#allocation4], 1
    %s1596 = scalar_lea.sflag [#allocation4], 1
    %1597 = vsyncpa %s1596, 1

</llo_original>
